<compile_context>
chip_gen: v7x
topology: tpu7x:2x2x1
jax: 0.10.0
libtpu: 0.0.40
codegen_flags: <defaults>
</compile_context>

<pallas_src>
import functools

import jax
import jax.numpy as jnp
import numpy as np
from jax import lax
from jax.experimental import pallas as pl
from jax.experimental.pallas import tpu as pltpu

_EPS = 1e-5
_VMEM_LIMIT = 32 * 1024 * 1024  # explicit scoped-VMEM limit; safe on v5e/v6e/v7x


# ------------------------------------------------------------------------------
# Kernel 1/2: one DilConv stage for ONE image, in the lane-dense flat-NHWC layout
#   prev-stage BN (fused) + ReLU -> in-kernel zero pad -> depthwise KxK
#   -> pointwise 1x1 (block-diagonal MXU matmul) -> y + packed BN partial stats
# ------------------------------------------------------------------------------
def _dilconv_stage_kernel(x_ref, bnm_ref, bni_ref, dwt_ref, pwh_ref, pwl_ref,
                          y_ref, st_ref, xpad_ref,
                          *, K, pad, H, W, C_in, Hf, Wf, precise):
    """
    x_ref   : (1, H, W*C_in)       un-normalized input slab (prev stage output or net input)
    bnm_ref : (1, W*C_in)          previous-stage BN mean, tiled over W (zeros for stage 1)
    bni_ref : (1, W*C_in)          previous-stage BN rsqrt(var+eps), tiled over W (ones for stage 1)
    dwt_ref : (K*K, Wf*C_in)       depthwise weights tiled over the Wf output positions
    pwh_ref : (Wf*C_in, Wf*C_out)  block-diagonal pointwise weights, bf16 high part
    pwl_ref : (Wf*C_in, Wf*C_out)  bf16 low part (only read when precise=True)
    y_ref   : (1, Hf, Wf*C_out)    un-normalized stage output (stride-1 geometry)
    st_ref  : (1, 2, Wf*C_out)     packed per-image BN partials: [sum(y); sum(y*y)] over rows
    xpad_ref: VMEM scratch (H+2*pad, (W+2*pad)*C_in) f32
    """
    WC = W * C_in
    WfC = Wf * C_in
    Hp = H + 2 * pad
    WpC = (W + 2 * pad) * C_in

    x = x_ref[0].astype(jnp.float32)                               # (H, W*C_in)
    # Previous stage's BatchNorm fused into this stage's ReLU.
    a = jnp.maximum((x - bnm_ref[...]) * bni_ref[...], 0.0)

    if pad > 0:
        # Zero only the pad border (interior is fully overwritten every step):
        # 4 thin strip stores instead of a full-slab clear (helps most on v5e's
        # single store slot).  Pad value 0 is only correct post-ReLU (>= 0).
        xpad_ref[0:pad, :] = jnp.zeros((pad, WpC), jnp.float32)
        xpad_ref[pad + H:Hp, :] = jnp.zeros((Hp - pad - H, WpC), jnp.float32)
        xpad_ref[pad:pad + H, 0:pad * C_in] = jnp.zeros((H, pad * C_in), jnp.float32)
        xpad_ref[pad:pad + H, pad * C_in + WC:WpC] = (
            jnp.zeros((H, WpC - pad * C_in - WC), jnp.float32))
        xpad_ref[pad:pad + H, pad * C_in:pad * C_in + WC] = a
        xp = xpad_ref[...]                                         # single load of the padded slab
    else:
        xp = a

    dwt = dwt_ref[...].astype(jnp.float32)                         # (K*K, Wf*C_in)

    # Depthwise KxK conv (stride-1 geometry): each tap window is a static
    # (sublane kh, lane kw*C_in) slice of the single loaded value -- the shifts
    # lower to XLU lane/sublane moves, not K*K masked VMEM ref loads.
    acc = jnp.zeros((Hf, WfC), jnp.float32)
    for kh in range(K):
        for kw in range(K):
            win = xp[kh:kh + Hf, kw * C_in:kw * C_in + WfC]
            acc = acc + win * dwt[kh * K + kw]

    # Pointwise 1x1 conv as a single lane-dense matmul against the block-diagonal
    # weight.  MXU operands are bf16 (native rate on v6e/v7x); precise=True adds the
    # bf16x3 low-order passes so the f32 mode stays within ~1e-5 of exact f32.
    a_hi = acc.astype(jnp.bfloat16)
    y = jnp.dot(a_hi, pwh_ref[...], preferred_element_type=jnp.float32)
    if precise:
        a_lo = (acc - a_hi.astype(jnp.float32)).astype(jnp.bfloat16)
        y = y + jnp.dot(a_lo, pwh_ref[...], preferred_element_type=jnp.float32)
        y = y + jnp.dot(a_hi, pwl_ref[...], preferred_element_type=jnp.float32)

    y_ref[0] = y.astype(y_ref.dtype)
    # Packed per-image BN partial statistics (one lane-dense output block per step),
    # computed from the f32 y (not the possibly-bf16 stored copy).
    st_ref[0, 0:1, :] = jnp.sum(y, axis=0, keepdims=True)
    st_ref[0, 1:2, :] = jnp.sum(y * y, axis=0, keepdims=True)


def _dilconv_stage(x_flat, H, W, C_in, dw, pw, prev_mean, prev_inv,
                   *, stride, padding, out_dtype, precise, eps=_EPS):
    """One DilConv stage on flat (N, H, W*C_in) slabs.

    Returns (y_flat, H_out, W_out, mean, inv): un-normalized stage output plus this
    stage's training-mode BN statistics (its normalization is fused into the consumer).
    """
    N = int(x_flat.shape[0])
    K = int(dw.shape[0])
    C_out = int(pw.shape[1])
    # The kernel always computes the stride-1 geometry; stride>1 subsamples below.
    Hf = H + 2 * padding - K + 1
    Wf = W + 2 * padding - K + 1
    assert Hf > 0 and Wf > 0
    # TODO(synk): the block-diagonal pointwise weight scales as (Wf*C_in)x(Wf*C_out);
    # for large channel counts switch to a channel-minor layout + plain MXU matmul.
    assert Wf * C_in <= 2048 and Wf * C_out <= 2048

    f32 = jnp.float32
    bnm = jnp.tile(prev_mean.astype(f32), W).reshape(1, W * C_in)
    bni = jnp.tile(prev_inv.astype(f32), W).reshape(1, W * C_in)
    dwt = jnp.tile(dw.astype(f32).reshape(K * K, C_in), (1, Wf))           # (K*K, Wf*C_in)
    eye = jnp.eye(Wf, dtype=f32)
    pw_bd = jnp.einsum("ij,cd->icjd", eye, pw.astype(f32)).reshape(Wf * C_in, Wf * C_out)
    pw_hi = pw_bd.astype(jnp.bfloat16)
    pw_lo = (pw_bd - pw_hi.astype(f32)).astype(jnp.bfloat16)

    kernel = functools.partial(
        _dilconv_stage_kernel, K=K, pad=padding, H=H, W=W, C_in=C_in,
        Hf=Hf, Wf=Wf, precise=precise)

    y, stats = pl.pallas_call(
        kernel,
        out_shape=(
            jax.ShapeDtypeStruct((N, Hf, Wf * C_out), out_dtype),
            jax.ShapeDtypeStruct((N, 2, Wf * C_out), f32),
        ),
        grid_spec=pltpu.PrefetchScalarGridSpec(
            num_scalar_prefetch=0,
            # One full image per step (hundreds of KiB at realistic DARTS sizes);
            # extent N is even in the demo so both v7x TensorCores get work.
            grid=(N,),
            in_specs=[
                pl.BlockSpec((1, H, W * C_in), lambda n: (n, 0, 0)),
                pl.BlockSpec((1, W * C_in), lambda n: (0, 0)),
                pl.BlockSpec((1, W * C_in), lambda n: (0, 0)),
                pl.BlockSpec((K * K, Wf * C_in), lambda n: (0, 0)),
                pl.BlockSpec((Wf * C_in, Wf * C_out), lambda n: (0, 0)),
                pl.BlockSpec((Wf * C_in, Wf * C_out), lambda n: (0, 0)),
            ],
            out_specs=(
                pl.BlockSpec((1, Hf, Wf * C_out), lambda n: (n, 0, 0)),
                pl.BlockSpec((1, 2, Wf * C_out), lambda n: (n, 0, 0)),
            ),
            scratch_shapes=[
                pltpu.VMEM((H + 2 * padding, (W + 2 * padding) * C_in), f32),
            ],
        ),
        compiler_params=pltpu.CompilerParams(
            dimension_semantics=("parallel",),
            vmem_limit_bytes=_VMEM_LIMIT,
        ),
    )(x_flat, bnm, bni, dwt, pw_hi, pw_lo)

    if stride == 1:
        H_out, W_out = Hf, Wf
        tot = jnp.sum(stats, axis=0).reshape(2, Wf, C_out).sum(axis=1)     # (2, C_out)
        cnt = float(N * H_out * W_out)
        mean = tot[0] / cnt
        # E[x^2] - mean^2 can cancel; clamped (activations here are O(1)).
        var = jnp.maximum(tot[1] / cnt - mean * mean, 0.0)
        y_out = y
    else:
        # TODO(synk): stride>1 falls back to an XLA subsample of the stride-1 output
        # (one extra pass; BN stats then come from the stored, possibly bf16, tensor).
        y4 = y.reshape(N, Hf, Wf, C_out)[:, ::stride, ::stride, :]
        H_out, W_out = int(y4.shape[1]), int(y4.shape[2])
        yf = y4.astype(f32)
        mean = jnp.mean(yf, axis=(0, 1, 2))
        var = jnp.maximum(jnp.mean(yf * yf, axis=(0, 1, 2)) - mean * mean, 0.0)
        y_out = y4.reshape(N, H_out, W_out * C_out)

    inv = lax.rsqrt(var + eps)
    return y_out, H_out, W_out, mean, inv


# ------------------------------------------------------------------------------
# Kernel 3: apply the final BatchNorm on lane-dense (rows, W*C) slabs.
# ------------------------------------------------------------------------------
def _bn_apply_kernel(y_ref, m_ref, i_ref, o_ref):
    o_ref[...] = (y_ref[...].astype(jnp.float32) - m_ref[...]) * i_ref[...]


def _pick_row_tile(total):
    # Largest (8,128)-friendly row tile <= 512 that divides `total`; big tiles amortize
    # the ~0.35us/step overhead on this memory-bound elementwise pass.
    for cand in (512, 256, 128, 64, 32, 16, 8):
        if total % cand == 0:
            return cand
    return total


def _bn_apply(y_flat, W, C, mean, inv):
    N, H, L = map(int, y_flat.shape)                     # L = W*C (lane-dense)
    y2d = y_flat.reshape(N * H, L)                       # free metadata reshape
    m = jnp.tile(mean.astype(jnp.float32), W).reshape(1, L)
    iv = jnp.tile(inv.astype(jnp.float32), W).reshape(1, L)
    R = N * H
    TR = _pick_row_tile(R)
    out = pl.pallas_call(
        _bn_apply_kernel,
        out_shape=jax.ShapeDtypeStruct((R, L), jnp.float32),
        grid_spec=pltpu.PrefetchScalarGridSpec(
            num_scalar_prefetch=0,
            grid=(R // TR,),
            in_specs=[
                pl.BlockSpec((TR, L), lambda r: (r, 0)),
                pl.BlockSpec((1, L), lambda r: (0, 0)),
                pl.BlockSpec((1, L), lambda r: (0, 0)),
            ],
            out_specs=pl.BlockSpec((TR, L), lambda r: (r, 0)),
        ),
        compiler_params=pltpu.CompilerParams(
            dimension_semantics=("parallel",),
            vmem_limit_bytes=_VMEM_LIMIT,
        ),
    )(y2d, m, iv)
    return out.reshape(N, H, L)


# ------------------------------------------------------------------------------
# Public SepConv forward (NCHW in / NCHW out, matching the PyTorch module)
# ------------------------------------------------------------------------------
def sepconv_forward(x_nchw, params, *, stride, padding,
                    interstage_dtype=jnp.bfloat16):
    """SepConv forward. x_nchw: (N, C_in, H, W) -> (N, C_out, H', W').

    interstage_dtype: HBM storage dtype of the two large intermediates (y1, y2).
      bfloat16 (default) halves the only big HBM round trips; float32 runs the op
      with bf16x3 MXU passes for tight numerical verification.
    """
    N, C_in, H, W = map(int, x_nchw.shape)
    C_mid = int(params["pw1"].shape[1])
    C_out = int(params["pw2"].shape[1])
    precise = jnp.dtype(interstage_dtype) == jnp.dtype(jnp.float32)

    # NCHW -> flat-NHWC (H, W*C) slabs.
    # TODO(synk): this boundary transpose (and the inverse one on the output) stays in
    # XLA; fusing it would need an in-kernel CHW<->HWC relayout -- not worth the
    # lowering risk at these channel counts.
    x_flat = jnp.transpose(x_nchw, (0, 2, 3, 1)).astype(jnp.float32).reshape(N, H, W * C_in)

    ident_mean = jnp.zeros((C_in,), jnp.float32)
    ident_inv = jnp.ones((C_in,), jnp.float32)

    # DilConv #1: plain ReLU (identity pre-norm); emits BN1 stats.
    y1, H1, W1, m1, i1 = _dilconv_stage(
        x_flat, H, W, C_in, params["dw1"], params["pw1"], ident_mean, ident_inv,
        stride=stride, padding=padding, out_dtype=interstage_dtype, precise=precise)

    # DilConv #2: BN1 fused into its ReLU, so y1 makes exactly one HBM round trip.
    y2, H2, W2, m2, i2 = _dilconv_stage(
        y1, H1, W1, C_mid, params["dw2"], params["pw2"], m1, i1,
        stride=1, padding=padding, out_dtype=interstage_dtype, precise=precise)

    # Final BN2 applied on lane-dense row slabs.
    out_flat = _bn_apply(y2, W2, C_out, m2, i2)                     # (N, H2, W2*C_out) f32
    out = out_flat.reshape(N, H2, W2, C_out)
    return jnp.transpose(out, (0, 3, 1, 2))                         # NHWC -> NCHW


# -------------------- pure-JAX reference (for validation) --------------------
def _dilconv_ref(x_nhwc, dw, pw, stride, padding, eps=_EPS):
    x = jax.nn.relu(x_nhwc)
    K, _, C = dw.shape
    C_out = pw.shape[1]
    dn = lax.conv_dimension_numbers(x.shape, (K, K, 1, C), ("NHWC", "HWIO", "NHWC"))
    y = lax.conv_general_dilated(
        x, dw.reshape(K, K, 1, C), (stride, stride),
        [(padding, padding), (padding, padding)],
        dimension_numbers=dn, feature_group_count=C,
    )
    dn2 = lax.conv_dimension_numbers(y.shape, (1, 1, C, C_out), ("NHWC", "HWIO", "NHWC"))
    y = lax.conv_general_dilated(
        y, pw.reshape(1, 1, C, C_out), (1, 1), [(0, 0), (0, 0)], dimension_numbers=dn2
    )
    mean = jnp.mean(y, axis=(0, 1, 2), keepdims=True)
    var = jnp.mean((y - mean) ** 2, axis=(0, 1, 2), keepdims=True)
    return (y - mean) * lax.rsqrt(var + eps)


def sepconv_ref(x_nchw, params, *, stride, padding):
    x = jnp.transpose(x_nchw, (0, 2, 3, 1))
    y = _dilconv_ref(x, params["dw1"], params["pw1"], stride, padding)
    y = _dilconv_ref(y, params["dw2"], params["pw2"], 1, padding)
    return jnp.transpose(y, (0, 3, 1, 2))


if __name__ == "__main__":
    # Standard DARTS sep_conv_3x3 configuration at small demo sizes.
    N, C_in, C_out, H, W = 2, 4, 8, 16, 16
    K, stride, padding = 3, 1, 1

    key = jax.random.PRNGKey(0)
    kx, k1, k2, k3, k4 = jax.random.split(key, 5)

    x = jax.random.normal(kx, (N, C_in, H, W), dtype=jnp.float32)
    params = {
        # DilConv #1: depthwise (K,K,C_in) [dw[kh,kw,c]==torch_w[c,0,kh,kw]], pointwise (C_in,C_in)
        "dw1": 0.2 * jax.random.normal(k1, (K, K, C_in), dtype=jnp.float32),
        "pw1": 0.2 * jax.random.normal(k2, (C_in, C_in), dtype=jnp.float32),
        # DilConv #2: depthwise (K,K,C_in), pointwise (C_in, C_out)
        "dw2": 0.2 * jax.random.normal(k3, (K, K, C_in), dtype=jnp.float32),
        "pw2": 0.2 * jax.random.normal(k4, (C_in, C_out), dtype=jnp.float32),
    }

    ref = jax.block_until_ready(sepconv_ref(x, params, stride=stride, padding=padding))

    # Strict check: f32 inter-stage storage + bf16x3 MXU passes (matmul error ~1e-5).
    fwd_f32 = jax.jit(functools.partial(
        sepconv_forward, stride=stride, padding=padding, interstage_dtype=jnp.float32))
    out_f32 = jax.block_until_ready(fwd_f32(x, params))
    np.testing.assert_allclose(np.asarray(out_f32), np.asarray(ref), rtol=1e-3, atol=1e-3)

    # Default performance mode: bf16 HBM storage of the intermediates + single-pass
    # bf16 MXU operands (expected deviation ~1e-2 of the unit-scale BN output).
    fwd_bf16 = jax.jit(functools.partial(
        sepconv_forward, stride=stride, padding=padding, interstage_dtype=jnp.bfloat16))
    out_bf16 = jax.block_until_ready(fwd_bf16(x, params))
    np.testing.assert_allclose(np.asarray(out_bf16), np.asarray(ref), rtol=8e-2, atol=8e-2)

    assert out_f32.shape == (N, C_out, H, W)
    print("KERNEL_OK")
</pallas_src>

<mosaic_0001>
module attributes {stable_mosaic.version = 11 : i64} {
  func.func @_dilconv_stage_kernel(%arg0: i32, %arg1: memref<1x16x64xf32, #tpu.memory_space<vmem>>, %arg2: memref<1x64xf32, #tpu.memory_space<vmem>>, %arg3: memref<1x64xf32, #tpu.memory_space<vmem>>, %arg4: memref<9x64xf32, #tpu.memory_space<vmem>>, %arg5: memref<64x64xbf16, #tpu.memory_space<vmem>>, %arg6: memref<64x64xbf16, #tpu.memory_space<vmem>>, %arg7: memref<1x16x64xf32, #tpu.memory_space<vmem>>, %arg8: memref<1x2x64xf32, #tpu.memory_space<vmem>>, %arg9: memref<18x72xf32, #tpu.memory_space<vmem>>) attributes {dimension_semantics = [#tpu.dimension_semantics<parallel>], iteration_bounds = array<i64: 2>, scalar_prefetch = 0 : i64, scratch_operands = 1 : i64, tpu.core_type = #tpu.core_type<tc>, window_params = [{transform_indices = @transform_0, window_bounds = array<i64: 1, 16, 64>}, {pipeline_mode = #tpu.pipeline_mode<synchronous>, transform_indices = @transform_1, window_bounds = array<i64: 1, 64>}, {pipeline_mode = #tpu.pipeline_mode<synchronous>, transform_indices = @transform_2, window_bounds = array<i64: 1, 64>}, {pipeline_mode = #tpu.pipeline_mode<synchronous>, transform_indices = @transform_3, window_bounds = array<i64: 9, 64>}, {pipeline_mode = #tpu.pipeline_mode<synchronous>, transform_indices = @transform_4, window_bounds = array<i64: 64, 64>}, {pipeline_mode = #tpu.pipeline_mode<synchronous>, transform_indices = @transform_5, window_bounds = array<i64: 64, 64>}, {transform_indices = @transform_6, window_bounds = array<i64: 1, 16, 64>}, {transform_indices = @transform_7, window_bounds = array<i64: 1, 2, 64>}]} {
    %c0 = arith.constant 0 : index
    %c0_0 = arith.constant 0 : index
    %c0_1 = arith.constant 0 : index
    %0 = vector.load %arg1[%c0, %c0_0, %c0_1] : memref<1x16x64xf32, #tpu.memory_space<vmem>>, vector<1x16x64xf32>
    %1 = vector.shape_cast %0 : vector<1x16x64xf32> to vector<16x64xf32>
    %c0_2 = arith.constant 0 : index
    %c0_3 = arith.constant 0 : index
    %2 = vector.load %arg2[%c0_2, %c0_3] : memref<1x64xf32, #tpu.memory_space<vmem>>, vector<1x64xf32>
    %3 = vector.broadcast %2 : vector<1x64xf32> to vector<16x64xf32>
    %4 = arith.subf %1, %3 : vector<16x64xf32>
    %c0_4 = arith.constant 0 : index
    %c0_5 = arith.constant 0 : index
    %5 = vector.load %arg3[%c0_4, %c0_5] : memref<1x64xf32, #tpu.memory_space<vmem>>, vector<1x64xf32>
    %6 = vector.broadcast %5 : vector<1x64xf32> to vector<16x64xf32>
    %7 = arith.mulf %4, %6 : vector<16x64xf32>
    %cst = arith.constant 0.000000e+00 : f32
    %8 = vector.broadcast %cst : f32 to vector<16x64xf32>
    %9 = arith.maximumf %7, %8 : vector<16x64xf32>
    %cst_6 = arith.constant 0.000000e+00 : f32
    %10 = vector.broadcast %cst_6 : f32 to vector<1x72xf32>
    %c0_7 = arith.constant 0 : index
    %c0_8 = arith.constant 0 : index
    %11 = vector.load %arg9[%c0_7, %c0_8] : memref<18x72xf32, #tpu.memory_space<vmem>>, vector<1x72xf32>
    tpu.vector_store %arg9[%c0_7, %c0_8], %10 {strides = array<i32>} : memref<18x72xf32, #tpu.memory_space<vmem>>, vector<1x72xf32>,
    %cst_9 = arith.constant 0.000000e+00 : f32
    %12 = vector.broadcast %cst_9 : f32 to vector<1x72xf32>
    %c17 = arith.constant 17 : index
    %c0_10 = arith.constant 0 : index
    %13 = vector.load %arg9[%c17, %c0_10] : memref<18x72xf32, #tpu.memory_space<vmem>>, vector<1x72xf32>
    tpu.vector_store %arg9[%c17, %c0_10], %12 {strides = array<i32>} : memref<18x72xf32, #tpu.memory_space<vmem>>, vector<1x72xf32>,
    %cst_11 = arith.constant 0.000000e+00 : f32
    %14 = vector.broadcast %cst_11 : f32 to vector<16x4xf32>
    %c1 = arith.constant 1 : index
    %c0_12 = arith.constant 0 : index
    %15 = vector.load %arg9[%c1, %c0_12] : memref<18x72xf32, #tpu.memory_space<vmem>>, vector<16x4xf32>
    tpu.vector_store %arg9[%c1, %c0_12], %14 {strides = array<i32>} : memref<18x72xf32, #tpu.memory_space<vmem>>, vector<16x4xf32>,
    %cst_13 = arith.constant 0.000000e+00 : f32
    %16 = vector.broadcast %cst_13 : f32 to vector<16x4xf32>
    %c1_14 = arith.constant 1 : index
    %c68 = arith.constant 68 : index
    %17 = vector.load %arg9[%c1_14, %c68] : memref<18x72xf32, #tpu.memory_space<vmem>>, vector<16x4xf32>
    tpu.vector_store %arg9[%c1_14, %c68], %16 {strides = array<i32>} : memref<18x72xf32, #tpu.memory_space<vmem>>, vector<16x4xf32>,
    %c1_15 = arith.constant 1 : index
    %c4 = arith.constant 4 : index
    %18 = vector.load %arg9[%c1_15, %c4] : memref<18x72xf32, #tpu.memory_space<vmem>>, vector<16x64xf32>
    tpu.vector_store %arg9[%c1_15, %c4], %9 {strides = array<i32>} : memref<18x72xf32, #tpu.memory_space<vmem>>, vector<16x64xf32>,
    %c0_16 = arith.constant 0 : index
    %c0_17 = arith.constant 0 : index
    %19 = vector.load %arg9[%c0_16, %c0_17] : memref<18x72xf32, #tpu.memory_space<vmem>>, vector<18x72xf32>
    %c0_18 = arith.constant 0 : index
    %c0_19 = arith.constant 0 : index
    %20 = vector.load %arg4[%c0_18, %c0_19] : memref<9x64xf32, #tpu.memory_space<vmem>>, vector<9x64xf32>
    %cst_20 = arith.constant 0.000000e+00 : f32
    %21 = vector.broadcast %cst_20 : f32 to vector<16x64xf32>
    %22 = vector.extract_strided_slice %19 {offsets = [0, 0], sizes = [16, 64], strides = [1, 1]} : vector<18x72xf32> to vector<16x64xf32>
    %23 = vector.extract_strided_slice %20 {offsets = [0, 0], sizes = [1, 64], strides = [1, 1]} : vector<9x64xf32> to vector<1x64xf32>
    %24 = vector.shape_cast %23 : vector<1x64xf32> to vector<64xf32>
    %25 = vector.shape_cast %24 : vector<64xf32> to vector<1x64xf32>
    %26 = vector.broadcast %25 : vector<1x64xf32> to vector<16x64xf32>
    %27 = arith.mulf %22, %26 : vector<16x64xf32>
    %28 = arith.addf %21, %27 : vector<16x64xf32>
    %29 = vector.extract_strided_slice %19 {offsets = [0, 4], sizes = [16, 64], strides = [1, 1]} : vector<18x72xf32> to vector<16x64xf32>
    %30 = vector.extract_strided_slice %20 {offsets = [1, 0], sizes = [1, 64], strides = [1, 1]} : vector<9x64xf32> to vector<1x64xf32>
    %31 = vector.shape_cast %30 : vector<1x64xf32> to vector<64xf32>
    %32 = vector.shape_cast %31 : vector<64xf32> to vector<1x64xf32>
    %33 = vector.broadcast %32 : vector<1x64xf32> to vector<16x64xf32>
    %34 = arith.mulf %29, %33 : vector<16x64xf32>
    %35 = arith.addf %28, %34 : vector<16x64xf32>
    %36 = vector.extract_strided_slice %19 {offsets = [0, 8], sizes = [16, 64], strides = [1, 1]} : vector<18x72xf32> to vector<16x64xf32>
    %37 = vector.extract_strided_slice %20 {offsets = [2, 0], sizes = [1, 64], strides = [1, 1]} : vector<9x64xf32> to vector<1x64xf32>
    %38 = vector.shape_cast %37 : vector<1x64xf32> to vector<64xf32>
    %39 = vector.shape_cast %38 : vector<64xf32> to vector<1x64xf32>
    %40 = vector.broadcast %39 : vector<1x64xf32> to vector<16x64xf32>
    %41 = arith.mulf %36, %40 : vector<16x64xf32>
    %42 = arith.addf %35, %41 : vector<16x64xf32>
    %43 = vector.extract_strided_slice %19 {offsets = [1, 0], sizes = [16, 64], strides = [1, 1]} : vector<18x72xf32> to vector<16x64xf32>
    %44 = vector.extract_strided_slice %20 {offsets = [3, 0], sizes = [1, 64], strides = [1, 1]} : vector<9x64xf32> to vector<1x64xf32>
    %45 = vector.shape_cast %44 : vector<1x64xf32> to vector<64xf32>
    %46 = vector.shape_cast %45 : vector<64xf32> to vector<1x64xf32>
    %47 = vector.broadcast %46 : vector<1x64xf32> to vector<16x64xf32>
    %48 = arith.mulf %43, %47 : vector<16x64xf32>
    %49 = arith.addf %42, %48 : vector<16x64xf32>
    %50 = vector.extract_strided_slice %19 {offsets = [1, 4], sizes = [16, 64], strides = [1, 1]} : vector<18x72xf32> to vector<16x64xf32>
    %51 = vector.extract_strided_slice %20 {offsets = [4, 0], sizes = [1, 64], strides = [1, 1]} : vector<9x64xf32> to vector<1x64xf32>
    %52 = vector.shape_cast %51 : vector<1x64xf32> to vector<64xf32>
    %53 = vector.shape_cast %52 : vector<64xf32> to vector<1x64xf32>
    %54 = vector.broadcast %53 : vector<1x64xf32> to vector<16x64xf32>
    %55 = arith.mulf %50, %54 : vector<16x64xf32>
    %56 = arith.addf %49, %55 : vector<16x64xf32>
    %57 = vector.extract_strided_slice %19 {offsets = [1, 8], sizes = [16, 64], strides = [1, 1]} : vector<18x72xf32> to vector<16x64xf32>
    %58 = vector.extract_strided_slice %20 {offsets = [5, 0], sizes = [1, 64], strides = [1, 1]} : vector<9x64xf32> to vector<1x64xf32>
    %59 = vector.shape_cast %58 : vector<1x64xf32> to vector<64xf32>
    %60 = vector.shape_cast %59 : vector<64xf32> to vector<1x64xf32>
    %61 = vector.broadcast %60 : vector<1x64xf32> to vector<16x64xf32>
    %62 = arith.mulf %57, %61 : vector<16x64xf32>
    %63 = arith.addf %56, %62 : vector<16x64xf32>
    %64 = vector.extract_strided_slice %19 {offsets = [2, 0], sizes = [16, 64], strides = [1, 1]} : vector<18x72xf32> to vector<16x64xf32>
    %65 = vector.extract_strided_slice %20 {offsets = [6, 0], sizes = [1, 64], strides = [1, 1]} : vector<9x64xf32> to vector<1x64xf32>
    %66 = vector.shape_cast %65 : vector<1x64xf32> to vector<64xf32>
    %67 = vector.shape_cast %66 : vector<64xf32> to vector<1x64xf32>
    %68 = vector.broadcast %67 : vector<1x64xf32> to vector<16x64xf32>
    %69 = arith.mulf %64, %68 : vector<16x64xf32>
    %70 = arith.addf %63, %69 : vector<16x64xf32>
    %71 = vector.extract_strided_slice %19 {offsets = [2, 4], sizes = [16, 64], strides = [1, 1]} : vector<18x72xf32> to vector<16x64xf32>
    %72 = vector.extract_strided_slice %20 {offsets = [7, 0], sizes = [1, 64], strides = [1, 1]} : vector<9x64xf32> to vector<1x64xf32>
    %73 = vector.shape_cast %72 : vector<1x64xf32> to vector<64xf32>
    %74 = vector.shape_cast %73 : vector<64xf32> to vector<1x64xf32>
    %75 = vector.broadcast %74 : vector<1x64xf32> to vector<16x64xf32>
    %76 = arith.mulf %71, %75 : vector<16x64xf32>
    %77 = arith.addf %70, %76 : vector<16x64xf32>
    %78 = vector.extract_strided_slice %19 {offsets = [2, 8], sizes = [16, 64], strides = [1, 1]} : vector<18x72xf32> to vector<16x64xf32>
    %79 = vector.extract_strided_slice %20 {offsets = [8, 0], sizes = [1, 64], strides = [1, 1]} : vector<9x64xf32> to vector<1x64xf32>
    %80 = vector.shape_cast %79 : vector<1x64xf32> to vector<64xf32>
    %81 = vector.shape_cast %80 : vector<64xf32> to vector<1x64xf32>
    %82 = vector.broadcast %81 : vector<1x64xf32> to vector<16x64xf32>
    %83 = arith.mulf %78, %82 : vector<16x64xf32>
    %84 = arith.addf %77, %83 : vector<16x64xf32>
    %85 = arith.truncf %84 : vector<16x64xf32> to vector<16x64xbf16>
    %c0_21 = arith.constant 0 : index
    %c0_22 = arith.constant 0 : index
    %86 = vector.load %arg5[%c0_21, %c0_22] : memref<64x64xbf16, #tpu.memory_space<vmem>>, vector<64x64xbf16>
    %cst_23 = arith.constant dense<0.000000e+00> : vector<16x64xf32>
    %87 = tpu.matmul %85, %86, %cst_23 {dimension_numbers = #tpu.dot_dimension_numbers<[1], [0], [0], [1], [0, 0, 1, 1], [], []>} : vector<16x64xbf16>, vector<64x64xbf16>, vector<16x64xf32> -> vector<16x64xf32>
    %88 = arith.extf %85 : vector<16x64xbf16> to vector<16x64xf32>
    %89 = arith.subf %84, %88 : vector<16x64xf32>
    %90 = arith.truncf %89 : vector<16x64xf32> to vector<16x64xbf16>
    %c0_24 = arith.constant 0 : index
    %c0_25 = arith.constant 0 : index
    %91 = vector.load %arg5[%c0_24, %c0_25] : memref<64x64xbf16, #tpu.memory_space<vmem>>, vector<64x64xbf16>
    %cst_26 = arith.constant dense<0.000000e+00> : vector<16x64xf32>
    %92 = tpu.matmul %90, %91, %cst_26 {dimension_numbers = #tpu.dot_dimension_numbers<[1], [0], [0], [1], [0, 0, 1, 1], [], []>} : vector<16x64xbf16>, vector<64x64xbf16>, vector<16x64xf32> -> vector<16x64xf32>
    %93 = arith.addf %87, %92 : vector<16x64xf32>
    %c0_27 = arith.constant 0 : index
    %c0_28 = arith.constant 0 : index
    %94 = vector.load %arg6[%c0_27, %c0_28] : memref<64x64xbf16, #tpu.memory_space<vmem>>, vector<64x64xbf16>
    %cst_29 = arith.constant dense<0.000000e+00> : vector<16x64xf32>
    %95 = tpu.matmul %85, %94, %cst_29 {dimension_numbers = #tpu.dot_dimension_numbers<[1], [0], [0], [1], [0, 0, 1, 1], [], []>} : vector<16x64xbf16>, vector<64x64xbf16>, vector<16x64xf32> -> vector<16x64xf32>
    %96 = arith.addf %93, %95 : vector<16x64xf32>
    %c0_30 = arith.constant 0 : index
    %c0_31 = arith.constant 0 : index
    %c0_32 = arith.constant 0 : index
    %97 = vector.load %arg7[%c0_30, %c0_31, %c0_32] : memref<1x16x64xf32, #tpu.memory_space<vmem>>, vector<1x16x64xf32>
    %98 = vector.shape_cast %97 : vector<1x16x64xf32> to vector<16x64xf32>
    %99 = vector.shape_cast %96 : vector<16x64xf32> to vector<1x16x64xf32>
    tpu.vector_store %arg7[%c0_30, %c0_31, %c0_32], %99 {strides = array<i32>} : memref<1x16x64xf32, #tpu.memory_space<vmem>>, vector<1x16x64xf32>,
    %cst_33 = arith.constant dense<0.000000e+00> : vector<64xf32>
    %100 = vector.multi_reduction <add>, %96, %cst_33 [0] : vector<16x64xf32> to vector<64xf32>
    %101 = vector.shape_cast %100 : vector<64xf32> to vector<1x64xf32>
    %c0_34 = arith.constant 0 : index
    %c0_35 = arith.constant 0 : index
    %c0_36 = arith.constant 0 : index
    %102 = vector.load %arg8[%c0_34, %c0_35, %c0_36] : memref<1x2x64xf32, #tpu.memory_space<vmem>>, vector<1x1x64xf32>
    %103 = vector.shape_cast %102 : vector<1x1x64xf32> to vector<1x64xf32>
    %104 = vector.shape_cast %101 : vector<1x64xf32> to vector<1x1x64xf32>
    tpu.vector_store %arg8[%c0_34, %c0_35, %c0_36], %104 {strides = array<i32>} : memref<1x2x64xf32, #tpu.memory_space<vmem>>, vector<1x1x64xf32>,
    %105 = arith.mulf %96, %96 : vector<16x64xf32>
    %cst_37 = arith.constant dense<0.000000e+00> : vector<64xf32>
    %106 = vector.multi_reduction <add>, %105, %cst_37 [0] : vector<16x64xf32> to vector<64xf32>
    %107 = vector.shape_cast %106 : vector<64xf32> to vector<1x64xf32>
    %c0_38 = arith.constant 0 : index
    %c1_39 = arith.constant 1 : index
    %c0_40 = arith.constant 0 : index
    %108 = vector.load %arg8[%c0_38, %c1_39, %c0_40] : memref<1x2x64xf32, #tpu.memory_space<vmem>>, vector<1x1x64xf32>
    %109 = vector.shape_cast %108 : vector<1x1x64xf32> to vector<1x64xf32>
    %110 = vector.shape_cast %107 : vector<1x64xf32> to vector<1x1x64xf32>
    tpu.vector_store %arg8[%c0_38, %c1_39, %c0_40], %110 {strides = array<i32>} : memref<1x2x64xf32, #tpu.memory_space<vmem>>, vector<1x1x64xf32>,
    return
  }
  func.func @transform_0(%arg0: i32) -> (i32, i32, i32) {
    %c0_i32 = arith.constant 0 : i32
    %c0_i32_0 = arith.constant 0 : i32
    %c0_i32_1 = arith.constant 0 : i32
    return %arg0, %c0_i32, %c0_i32_0 : i32, i32, i32
  }
  func.func @transform_1(%arg0: i32) -> (i32, i32) {
    %c0_i32 = arith.constant 0 : i32
    %c0_i32_0 = arith.constant 0 : i32
    %c0_i32_1 = arith.constant 0 : i32
    return %c0_i32, %c0_i32_0 : i32, i32
  }
  func.func @transform_2(%arg0: i32) -> (i32, i32) {
    %c0_i32 = arith.constant 0 : i32
    %c0_i32_0 = arith.constant 0 : i32
    %c0_i32_1 = arith.constant 0 : i32
    return %c0_i32, %c0_i32_0 : i32, i32
  }
  func.func @transform_3(%arg0: i32) -> (i32, i32) {
    %c0_i32 = arith.constant 0 : i32
    %c0_i32_0 = arith.constant 0 : i32
    %c0_i32_1 = arith.constant 0 : i32
    return %c0_i32, %c0_i32_0 : i32, i32
  }
  func.func @transform_4(%arg0: i32) -> (i32, i32) {
    %c0_i32 = arith.constant 0 : i32
    %c0_i32_0 = arith.constant 0 : i32
    %c0_i32_1 = arith.constant 0 : i32
    return %c0_i32, %c0_i32_0 : i32, i32
  }
  func.func @transform_5(%arg0: i32) -> (i32, i32) {
    %c0_i32 = arith.constant 0 : i32
    %c0_i32_0 = arith.constant 0 : i32
    %c0_i32_1 = arith.constant 0 : i32
    return %c0_i32, %c0_i32_0 : i32, i32
  }
  func.func @transform_6(%arg0: i32) -> (i32, i32, i32) {
    %c0_i32 = arith.constant 0 : i32
    %c0_i32_0 = arith.constant 0 : i32
    %c0_i32_1 = arith.constant 0 : i32
    return %arg0, %c0_i32, %c0_i32_0 : i32, i32, i32
  }
  func.func @transform_7(%arg0: i32) -> (i32, i32, i32) {
    %c0_i32 = arith.constant 0 : i32
    %c0_i32_0 = arith.constant 0 : i32
    %c0_i32_1 = arith.constant 0 : i32
    return %arg0, %c0_i32, %c0_i32_0 : i32, i32, i32
  }
}

module attributes {stable_mosaic.version = 11 : i64} {
  func.func @_dilconv_stage_kernel(%arg0: i32, %arg1: memref<1x16x64xf32, #tpu.memory_space<vmem>>, %arg2: memref<1x64xf32, #tpu.memory_space<vmem>>, %arg3: memref<1x64xf32, #tpu.memory_space<vmem>>, %arg4: memref<9x64xf32, #tpu.memory_space<vmem>>, %arg5: memref<64x128xbf16, #tpu.memory_space<vmem>>, %arg6: memref<64x128xbf16, #tpu.memory_space<vmem>>, %arg7: memref<1x16x128xf32, #tpu.memory_space<vmem>>, %arg8: memref<1x2x128xf32, #tpu.memory_space<vmem>>, %arg9: memref<18x72xf32, #tpu.memory_space<vmem>>) attributes {dimension_semantics = [#tpu.dimension_semantics<parallel>], iteration_bounds = array<i64: 2>, scalar_prefetch = 0 : i64, scratch_operands = 1 : i64, tpu.core_type = #tpu.core_type<tc>, window_params = [{transform_indices = @transform_0, window_bounds = array<i64: 1, 16, 64>}, {pipeline_mode = #tpu.pipeline_mode<synchronous>, transform_indices = @transform_1, window_bounds = array<i64: 1, 64>}, {pipeline_mode = #tpu.pipeline_mode<synchronous>, transform_indices = @transform_2, window_bounds = array<i64: 1, 64>}, {pipeline_mode = #tpu.pipeline_mode<synchronous>, transform_indices = @transform_3, window_bounds = array<i64: 9, 64>}, {pipeline_mode = #tpu.pipeline_mode<synchronous>, transform_indices = @transform_4, window_bounds = array<i64: 64, 128>}, {pipeline_mode = #tpu.pipeline_mode<synchronous>, transform_indices = @transform_5, window_bounds = array<i64: 64, 128>}, {transform_indices = @transform_6, window_bounds = array<i64: 1, 16, 128>}, {transform_indices = @transform_7, window_bounds = array<i64: 1, 2, 128>}]} {
    %c0 = arith.constant 0 : index
    %c0_0 = arith.constant 0 : index
    %c0_1 = arith.constant 0 : index
    %0 = vector.load %arg1[%c0, %c0_0, %c0_1] : memref<1x16x64xf32, #tpu.memory_space<vmem>>, vector<1x16x64xf32>
    %1 = vector.shape_cast %0 : vector<1x16x64xf32> to vector<16x64xf32>
    %c0_2 = arith.constant 0 : index
    %c0_3 = arith.constant 0 : index
    %2 = vector.load %arg2[%c0_2, %c0_3] : memref<1x64xf32, #tpu.memory_space<vmem>>, vector<1x64xf32>
    %3 = vector.broadcast %2 : vector<1x64xf32> to vector<16x64xf32>
    %4 = arith.subf %1, %3 : vector<16x64xf32>
    %c0_4 = arith.constant 0 : index
    %c0_5 = arith.constant 0 : index
    %5 = vector.load %arg3[%c0_4, %c0_5] : memref<1x64xf32, #tpu.memory_space<vmem>>, vector<1x64xf32>
    %6 = vector.broadcast %5 : vector<1x64xf32> to vector<16x64xf32>
    %7 = arith.mulf %4, %6 : vector<16x64xf32>
    %cst = arith.constant 0.000000e+00 : f32
    %8 = vector.broadcast %cst : f32 to vector<16x64xf32>
    %9 = arith.maximumf %7, %8 : vector<16x64xf32>
    %cst_6 = arith.constant 0.000000e+00 : f32
    %10 = vector.broadcast %cst_6 : f32 to vector<1x72xf32>
    %c0_7 = arith.constant 0 : index
    %c0_8 = arith.constant 0 : index
    %11 = vector.load %arg9[%c0_7, %c0_8] : memref<18x72xf32, #tpu.memory_space<vmem>>, vector<1x72xf32>
    tpu.vector_store %arg9[%c0_7, %c0_8], %10 {strides = array<i32>} : memref<18x72xf32, #tpu.memory_space<vmem>>, vector<1x72xf32>,
    %cst_9 = arith.constant 0.000000e+00 : f32
    %12 = vector.broadcast %cst_9 : f32 to vector<1x72xf32>
    %c17 = arith.constant 17 : index
    %c0_10 = arith.constant 0 : index
    %13 = vector.load %arg9[%c17, %c0_10] : memref<18x72xf32, #tpu.memory_space<vmem>>, vector<1x72xf32>
    tpu.vector_store %arg9[%c17, %c0_10], %12 {strides = array<i32>} : memref<18x72xf32, #tpu.memory_space<vmem>>, vector<1x72xf32>,
    %cst_11 = arith.constant 0.000000e+00 : f32
    %14 = vector.broadcast %cst_11 : f32 to vector<16x4xf32>
    %c1 = arith.constant 1 : index
    %c0_12 = arith.constant 0 : index
    %15 = vector.load %arg9[%c1, %c0_12] : memref<18x72xf32, #tpu.memory_space<vmem>>, vector<16x4xf32>
    tpu.vector_store %arg9[%c1, %c0_12], %14 {strides = array<i32>} : memref<18x72xf32, #tpu.memory_space<vmem>>, vector<16x4xf32>,
    %cst_13 = arith.constant 0.000000e+00 : f32
    %16 = vector.broadcast %cst_13 : f32 to vector<16x4xf32>
    %c1_14 = arith.constant 1 : index
    %c68 = arith.constant 68 : index
    %17 = vector.load %arg9[%c1_14, %c68] : memref<18x72xf32, #tpu.memory_space<vmem>>, vector<16x4xf32>
    tpu.vector_store %arg9[%c1_14, %c68], %16 {strides = array<i32>} : memref<18x72xf32, #tpu.memory_space<vmem>>, vector<16x4xf32>,
    %c1_15 = arith.constant 1 : index
    %c4 = arith.constant 4 : index
    %18 = vector.load %arg9[%c1_15, %c4] : memref<18x72xf32, #tpu.memory_space<vmem>>, vector<16x64xf32>
    tpu.vector_store %arg9[%c1_15, %c4], %9 {strides = array<i32>} : memref<18x72xf32, #tpu.memory_space<vmem>>, vector<16x64xf32>,
    %c0_16 = arith.constant 0 : index
    %c0_17 = arith.constant 0 : index
    %19 = vector.load %arg9[%c0_16, %c0_17] : memref<18x72xf32, #tpu.memory_space<vmem>>, vector<18x72xf32>
    %c0_18 = arith.constant 0 : index
    %c0_19 = arith.constant 0 : index
    %20 = vector.load %arg4[%c0_18, %c0_19] : memref<9x64xf32, #tpu.memory_space<vmem>>, vector<9x64xf32>
    %cst_20 = arith.constant 0.000000e+00 : f32
    %21 = vector.broadcast %cst_20 : f32 to vector<16x64xf32>
    %22 = vector.extract_strided_slice %19 {offsets = [0, 0], sizes = [16, 64], strides = [1, 1]} : vector<18x72xf32> to vector<16x64xf32>
    %23 = vector.extract_strided_slice %20 {offsets = [0, 0], sizes = [1, 64], strides = [1, 1]} : vector<9x64xf32> to vector<1x64xf32>
    %24 = vector.shape_cast %23 : vector<1x64xf32> to vector<64xf32>
    %25 = vector.shape_cast %24 : vector<64xf32> to vector<1x64xf32>
    %26 = vector.broadcast %25 : vector<1x64xf32> to vector<16x64xf32>
    %27 = arith.mulf %22, %26 : vector<16x64xf32>
    %28 = arith.addf %21, %27 : vector<16x64xf32>
    %29 = vector.extract_strided_slice %19 {offsets = [0, 4], sizes = [16, 64], strides = [1, 1]} : vector<18x72xf32> to vector<16x64xf32>
    %30 = vector.extract_strided_slice %20 {offsets = [1, 0], sizes = [1, 64], strides = [1, 1]} : vector<9x64xf32> to vector<1x64xf32>
    %31 = vector.shape_cast %30 : vector<1x64xf32> to vector<64xf32>
    %32 = vector.shape_cast %31 : vector<64xf32> to vector<1x64xf32>
    %33 = vector.broadcast %32 : vector<1x64xf32> to vector<16x64xf32>
    %34 = arith.mulf %29, %33 : vector<16x64xf32>
    %35 = arith.addf %28, %34 : vector<16x64xf32>
    %36 = vector.extract_strided_slice %19 {offsets = [0, 8], sizes = [16, 64], strides = [1, 1]} : vector<18x72xf32> to vector<16x64xf32>
    %37 = vector.extract_strided_slice %20 {offsets = [2, 0], sizes = [1, 64], strides = [1, 1]} : vector<9x64xf32> to vector<1x64xf32>
    %38 = vector.shape_cast %37 : vector<1x64xf32> to vector<64xf32>
    %39 = vector.shape_cast %38 : vector<64xf32> to vector<1x64xf32>
    %40 = vector.broadcast %39 : vector<1x64xf32> to vector<16x64xf32>
    %41 = arith.mulf %36, %40 : vector<16x64xf32>
    %42 = arith.addf %35, %41 : vector<16x64xf32>
    %43 = vector.extract_strided_slice %19 {offsets = [1, 0], sizes = [16, 64], strides = [1, 1]} : vector<18x72xf32> to vector<16x64xf32>
    %44 = vector.extract_strided_slice %20 {offsets = [3, 0], sizes = [1, 64], strides = [1, 1]} : vector<9x64xf32> to vector<1x64xf32>
    %45 = vector.shape_cast %44 : vector<1x64xf32> to vector<64xf32>
    %46 = vector.shape_cast %45 : vector<64xf32> to vector<1x64xf32>
    %47 = vector.broadcast %46 : vector<1x64xf32> to vector<16x64xf32>
    %48 = arith.mulf %43, %47 : vector<16x64xf32>
    %49 = arith.addf %42, %48 : vector<16x64xf32>
    %50 = vector.extract_strided_slice %19 {offsets = [1, 4], sizes = [16, 64], strides = [1, 1]} : vector<18x72xf32> to vector<16x64xf32>
    %51 = vector.extract_strided_slice %20 {offsets = [4, 0], sizes = [1, 64], strides = [1, 1]} : vector<9x64xf32> to vector<1x64xf32>
    %52 = vector.shape_cast %51 : vector<1x64xf32> to vector<64xf32>
    %53 = vector.shape_cast %52 : vector<64xf32> to vector<1x64xf32>
    %54 = vector.broadcast %53 : vector<1x64xf32> to vector<16x64xf32>
    %55 = arith.mulf %50, %54 : vector<16x64xf32>
    %56 = arith.addf %49, %55 : vector<16x64xf32>
    %57 = vector.extract_strided_slice %19 {offsets = [1, 8], sizes = [16, 64], strides = [1, 1]} : vector<18x72xf32> to vector<16x64xf32>
    %58 = vector.extract_strided_slice %20 {offsets = [5, 0], sizes = [1, 64], strides = [1, 1]} : vector<9x64xf32> to vector<1x64xf32>
    %59 = vector.shape_cast %58 : vector<1x64xf32> to vector<64xf32>
    %60 = vector.shape_cast %59 : vector<64xf32> to vector<1x64xf32>
    %61 = vector.broadcast %60 : vector<1x64xf32> to vector<16x64xf32>
    %62 = arith.mulf %57, %61 : vector<16x64xf32>
    %63 = arith.addf %56, %62 : vector<16x64xf32>
    %64 = vector.extract_strided_slice %19 {offsets = [2, 0], sizes = [16, 64], strides = [1, 1]} : vector<18x72xf32> to vector<16x64xf32>
    %65 = vector.extract_strided_slice %20 {offsets = [6, 0], sizes = [1, 64], strides = [1, 1]} : vector<9x64xf32> to vector<1x64xf32>
    %66 = vector.shape_cast %65 : vector<1x64xf32> to vector<64xf32>
    %67 = vector.shape_cast %66 : vector<64xf32> to vector<1x64xf32>
    %68 = vector.broadcast %67 : vector<1x64xf32> to vector<16x64xf32>
    %69 = arith.mulf %64, %68 : vector<16x64xf32>
    %70 = arith.addf %63, %69 : vector<16x64xf32>
    %71 = vector.extract_strided_slice %19 {offsets = [2, 4], sizes = [16, 64], strides = [1, 1]} : vector<18x72xf32> to vector<16x64xf32>
    %72 = vector.extract_strided_slice %20 {offsets = [7, 0], sizes = [1, 64], strides = [1, 1]} : vector<9x64xf32> to vector<1x64xf32>
    %73 = vector.shape_cast %72 : vector<1x64xf32> to vector<64xf32>
    %74 = vector.shape_cast %73 : vector<64xf32> to vector<1x64xf32>
    %75 = vector.broadcast %74 : vector<1x64xf32> to vector<16x64xf32>
    %76 = arith.mulf %71, %75 : vector<16x64xf32>
    %77 = arith.addf %70, %76 : vector<16x64xf32>
    %78 = vector.extract_strided_slice %19 {offsets = [2, 8], sizes = [16, 64], strides = [1, 1]} : vector<18x72xf32> to vector<16x64xf32>
    %79 = vector.extract_strided_slice %20 {offsets = [8, 0], sizes = [1, 64], strides = [1, 1]} : vector<9x64xf32> to vector<1x64xf32>
    %80 = vector.shape_cast %79 : vector<1x64xf32> to vector<64xf32>
    %81 = vector.shape_cast %80 : vector<64xf32> to vector<1x64xf32>
    %82 = vector.broadcast %81 : vector<1x64xf32> to vector<16x64xf32>
    %83 = arith.mulf %78, %82 : vector<16x64xf32>
    %84 = arith.addf %77, %83 : vector<16x64xf32>
    %85 = arith.truncf %84 : vector<16x64xf32> to vector<16x64xbf16>
    %c0_21 = arith.constant 0 : index
    %c0_22 = arith.constant 0 : index
    %86 = vector.load %arg5[%c0_21, %c0_22] : memref<64x128xbf16, #tpu.memory_space<vmem>>, vector<64x128xbf16>
    %cst_23 = arith.constant dense<0.000000e+00> : vector<16x128xf32>
    %87 = tpu.matmul %85, %86, %cst_23 {dimension_numbers = #tpu.dot_dimension_numbers<[1], [0], [0], [1], [0, 0, 1, 1], [], []>} : vector<16x64xbf16>, vector<64x128xbf16>, vector<16x128xf32> -> vector<16x128xf32>
    %88 = arith.extf %85 : vector<16x64xbf16> to vector<16x64xf32>
    %89 = arith.subf %84, %88 : vector<16x64xf32>
    %90 = arith.truncf %89 : vector<16x64xf32> to vector<16x64xbf16>
    %c0_24 = arith.constant 0 : index
    %c0_25 = arith.constant 0 : index
    %91 = vector.load %arg5[%c0_24, %c0_25] : memref<64x128xbf16, #tpu.memory_space<vmem>>, vector<64x128xbf16>
    %cst_26 = arith.constant dense<0.000000e+00> : vector<16x128xf32>
    %92 = tpu.matmul %90, %91, %cst_26 {dimension_numbers = #tpu.dot_dimension_numbers<[1], [0], [0], [1], [0, 0, 1, 1], [], []>} : vector<16x64xbf16>, vector<64x128xbf16>, vector<16x128xf32> -> vector<16x128xf32>
    %93 = arith.addf %87, %92 : vector<16x128xf32>
    %c0_27 = arith.constant 0 : index
    %c0_28 = arith.constant 0 : index
    %94 = vector.load %arg6[%c0_27, %c0_28] : memref<64x128xbf16, #tpu.memory_space<vmem>>, vector<64x128xbf16>
    %cst_29 = arith.constant dense<0.000000e+00> : vector<16x128xf32>
    %95 = tpu.matmul %85, %94, %cst_29 {dimension_numbers = #tpu.dot_dimension_numbers<[1], [0], [0], [1], [0, 0, 1, 1], [], []>} : vector<16x64xbf16>, vector<64x128xbf16>, vector<16x128xf32> -> vector<16x128xf32>
    %96 = arith.addf %93, %95 : vector<16x128xf32>
    %c0_30 = arith.constant 0 : index
    %c0_31 = arith.constant 0 : index
    %c0_32 = arith.constant 0 : index
    %97 = vector.load %arg7[%c0_30, %c0_31, %c0_32] : memref<1x16x128xf32, #tpu.memory_space<vmem>>, vector<1x16x128xf32>
    %98 = vector.shape_cast %97 : vector<1x16x128xf32> to vector<16x128xf32>
    %99 = vector.shape_cast %96 : vector<16x128xf32> to vector<1x16x128xf32>
    tpu.vector_store %arg7[%c0_30, %c0_31, %c0_32], %99 {strides = array<i32>} : memref<1x16x128xf32, #tpu.memory_space<vmem>>, vector<1x16x128xf32>,
    %cst_33 = arith.constant dense<0.000000e+00> : vector<128xf32>
    %100 = vector.multi_reduction <add>, %96, %cst_33 [0] : vector<16x128xf32> to vector<128xf32>
    %101 = vector.shape_cast %100 : vector<128xf32> to vector<1x128xf32>
    %c0_34 = arith.constant 0 : index
    %c0_35 = arith.constant 0 : index
    %c0_36 = arith.constant 0 : index
    %102 = vector.load %arg8[%c0_34, %c0_35, %c0_36] : memref<1x2x128xf32, #tpu.memory_space<vmem>>, vector<1x1x128xf32>
    %103 = vector.shape_cast %102 : vector<1x1x128xf32> to vector<1x128xf32>
    %104 = vector.shape_cast %101 : vector<1x128xf32> to vector<1x1x128xf32>
    tpu.vector_store %arg8[%c0_34, %c0_35, %c0_36], %104 {strides = array<i32>} : memref<1x2x128xf32, #tpu.memory_space<vmem>>, vector<1x1x128xf32>,
    %105 = arith.mulf %96, %96 : vector<16x128xf32>
    %cst_37 = arith.constant dense<0.000000e+00> : vector<128xf32>
    %106 = vector.multi_reduction <add>, %105, %cst_37 [0] : vector<16x128xf32> to vector<128xf32>
    %107 = vector.shape_cast %106 : vector<128xf32> to vector<1x128xf32>
    %c0_38 = arith.constant 0 : index
    %c1_39 = arith.constant 1 : index
    %c0_40 = arith.constant 0 : index
    %108 = vector.load %arg8[%c0_38, %c1_39, %c0_40] : memref<1x2x128xf32, #tpu.memory_space<vmem>>, vector<1x1x128xf32>
    %109 = vector.shape_cast %108 : vector<1x1x128xf32> to vector<1x128xf32>
    %110 = vector.shape_cast %107 : vector<1x128xf32> to vector<1x1x128xf32>
    tpu.vector_store %arg8[%c0_38, %c1_39, %c0_40], %110 {strides = array<i32>} : memref<1x2x128xf32, #tpu.memory_space<vmem>>, vector<1x1x128xf32>,
    return
  }
  func.func @transform_0(%arg0: i32) -> (i32, i32, i32) {
    %c0_i32 = arith.constant 0 : i32
    %c0_i32_0 = arith.constant 0 : i32
    %c0_i32_1 = arith.constant 0 : i32
    return %arg0, %c0_i32, %c0_i32_0 : i32, i32, i32
  }
  func.func @transform_1(%arg0: i32) -> (i32, i32) {
    %c0_i32 = arith.constant 0 : i32
    %c0_i32_0 = arith.constant 0 : i32
    %c0_i32_1 = arith.constant 0 : i32
    return %c0_i32, %c0_i32_0 : i32, i32
  }
  func.func @transform_2(%arg0: i32) -> (i32, i32) {
    %c0_i32 = arith.constant 0 : i32
    %c0_i32_0 = arith.constant 0 : i32
    %c0_i32_1 = arith.constant 0 : i32
    return %c0_i32, %c0_i32_0 : i32, i32
  }
  func.func @transform_3(%arg0: i32) -> (i32, i32) {
    %c0_i32 = arith.constant 0 : i32
    %c0_i32_0 = arith.constant 0 : i32
    %c0_i32_1 = arith.constant 0 : i32
    return %c0_i32, %c0_i32_0 : i32, i32
  }
  func.func @transform_4(%arg0: i32) -> (i32, i32) {
    %c0_i32 = arith.constant 0 : i32
    %c0_i32_0 = arith.constant 0 : i32
    %c0_i32_1 = arith.constant 0 : i32
    return %c0_i32, %c0_i32_0 : i32, i32
  }
  func.func @transform_5(%arg0: i32) -> (i32, i32) {
    %c0_i32 = arith.constant 0 : i32
    %c0_i32_0 = arith.constant 0 : i32
    %c0_i32_1 = arith.constant 0 : i32
    return %c0_i32, %c0_i32_0 : i32, i32
  }
  func.func @transform_6(%arg0: i32) -> (i32, i32, i32) {
    %c0_i32 = arith.constant 0 : i32
    %c0_i32_0 = arith.constant 0 : i32
    %c0_i32_1 = arith.constant 0 : i32
    return %arg0, %c0_i32, %c0_i32_0 : i32, i32, i32
  }
  func.func @transform_7(%arg0: i32) -> (i32, i32, i32) {
    %c0_i32 = arith.constant 0 : i32
    %c0_i32_0 = arith.constant 0 : i32
    %c0_i32_1 = arith.constant 0 : i32
    return %arg0, %c0_i32, %c0_i32_0 : i32, i32, i32
  }
}

module attributes {stable_mosaic.version = 11 : i64} {
  func.func @_bn_apply_kernel(%arg0: i32, %arg1: memref<32x128xf32, #tpu.memory_space<vmem>>, %arg2: memref<1x128xf32, #tpu.memory_space<vmem>>, %arg3: memref<1x128xf32, #tpu.memory_space<vmem>>, %arg4: memref<32x128xf32, #tpu.memory_space<vmem>>) attributes {dimension_semantics = [#tpu.dimension_semantics<parallel>], iteration_bounds = array<i64: 1>, scalar_prefetch = 0 : i64, scratch_operands = 0 : i64, tpu.core_type = #tpu.core_type<tc>, window_params = [{transform_indices = @transform_0, window_bounds = array<i64: 32, 128>}, {pipeline_mode = #tpu.pipeline_mode<synchronous>, transform_indices = @transform_1, window_bounds = array<i64: 1, 128>}, {pipeline_mode = #tpu.pipeline_mode<synchronous>, transform_indices = @transform_2, window_bounds = array<i64: 1, 128>}, {transform_indices = @transform_3, window_bounds = array<i64: 32, 128>}]} {
    %c0 = arith.constant 0 : index
    %c0_0 = arith.constant 0 : index
    %0 = vector.load %arg1[%c0, %c0_0] : memref<32x128xf32, #tpu.memory_space<vmem>>, vector<32x128xf32>
    %c0_1 = arith.constant 0 : index
    %c0_2 = arith.constant 0 : index
    %1 = vector.load %arg2[%c0_1, %c0_2] : memref<1x128xf32, #tpu.memory_space<vmem>>, vector<1x128xf32>
    %2 = vector.broadcast %1 : vector<1x128xf32> to vector<32x128xf32>
    %3 = arith.subf %0, %2 : vector<32x128xf32>
    %c0_3 = arith.constant 0 : index
    %c0_4 = arith.constant 0 : index
    %4 = vector.load %arg3[%c0_3, %c0_4] : memref<1x128xf32, #tpu.memory_space<vmem>>, vector<1x128xf32>
    %5 = vector.broadcast %4 : vector<1x128xf32> to vector<32x128xf32>
    %6 = arith.mulf %3, %5 : vector<32x128xf32>
    %c0_5 = arith.constant 0 : index
    %c0_6 = arith.constant 0 : index
    %7 = vector.load %arg4[%c0_5, %c0_6] : memref<32x128xf32, #tpu.memory_space<vmem>>, vector<32x128xf32>
    tpu.vector_store %arg4[%c0_5, %c0_6], %6 {strides = array<i32>} : memref<32x128xf32, #tpu.memory_space<vmem>>, vector<32x128xf32>,
    return
  }
  func.func @transform_0(%arg0: i32) -> (i32, i32) {
    %c0_i32 = arith.constant 0 : i32
    %c0_i32_0 = arith.constant 0 : i32
    return %arg0, %c0_i32 : i32, i32
  }
  func.func @transform_1(%arg0: i32) -> (i32, i32) {
    %c0_i32 = arith.constant 0 : i32
    %c0_i32_0 = arith.constant 0 : i32
    %c0_i32_1 = arith.constant 0 : i32
    return %c0_i32, %c0_i32_0 : i32, i32
  }
  func.func @transform_2(%arg0: i32) -> (i32, i32) {
    %c0_i32 = arith.constant 0 : i32
    %c0_i32_0 = arith.constant 0 : i32
    %c0_i32_1 = arith.constant 0 : i32
    return %c0_i32, %c0_i32_0 : i32, i32
  }
  func.func @transform_3(%arg0: i32) -> (i32, i32) {
    %c0_i32 = arith.constant 0 : i32
    %c0_i32_0 = arith.constant 0 : i32
    return %arg0, %c0_i32 : i32, i32
  }
}

</mosaic_0001>

<llo_original>
// kernel: tile.30
$region0: #{tile.30}
  #allocation0 [shape = 's32[1]{0}', space=sflag, size = 0x4, scoped, tag = 'scoped memory for tile.30']
  %s0 = inlined_call_operand.<no memory space> [shape: f32[], index: 0, kind: input, shape index: {}]
  %s1 = inlined_call_operand.vmem [shape: f32[1,64], index: 1, kind: output, shape index: {}]
  %v2 = vstv %s0
  %3 = vst [vmem:[%s1] sm:$0x1] %v2

// kernel: tile.39
$region0: #{tile.39}
  #allocation0 [shape = 's32[1]{0}', space=sflag, size = 0x4, scoped, tag = 'scoped memory for tile.39']
  %s0 = inlined_call_operand.vmem [shape: f32[4], index: 0, kind: input, shape index: {}]
  %s1 = inlined_call_operand.vmem [shape: f32[16,4], index: 1, kind: output, shape index: {}]
  // Predicated region
  $region2: #{tile.39} parent=0 // pred_check
    _
  $region3: #{tile.39} parent=0 // pred_check_branch
    %3 = sbr.rel (0) target = $region5
  $region4: #{tile.39} parent=0 // pred_region
    _
  $region5: #{tile.39} parent=0 // pred_fallthru
    _
  %v4 = vld [vmem:[%s0] ss:$0 sm:$0xff]
  %5 = vst [vmem:[%s1] sm:$0xff] %v4
  %s6 = scalar_lea.vmem %s1, 8
  %7 = vst [vmem:[%s6] sm:$0xff] %v4

// kernel: tile.40
$region0: #{tile.40}
  %s0 = inlined_call_operand.vmem [shape: f32[16,4], index: 0, kind: input, shape index: {}]
  %s1 = inlined_call_operand.vmem [shape: f32[1,64], index: 1, kind: output, shape index: {}]
  $region1: #{tile.40} parent=0
    #allocation0 [shape = 'u8[4096]{0}', space=vmem, size = 0x1000, scoped, tag = 'scoped mem for output reshape']
    %v2 = vld [vmem:[%s0] sm:$0x1]
    %vm3 = vcmask 31744
    %4 = vst.msk [vmem:[#allocation0] sm:$0x1] %vm3, %v2
    %s5 = scalar_lea.vmem %s0, 15
    %v6 = vld [vmem:[%s5] sm:$0x1]
    %7 = vrot.lane.b32.xlu0 %v6, 60
    %v8 = vpop.permute.xlu0 %7
    %vm9 = vcmask 523744
    %10 = vst.msk [vmem:[#allocation0] sm:$0x1] %vm9, %v8
    %s11 = scalar_lea.vmem %s0, 14
    %v12 = vld [vmem:[%s11] sm:$0x1]
    %13 = vrot.lane.b32.xlu0 %v12, 56
    %v14 = vpop.permute.xlu0 %13
    %vm15 = vcmask 490944
    %16 = vst.msk [vmem:[#allocation0] sm:$0x1] %vm15, %v14
    %s17 = scalar_lea.vmem %s0, 13
    %v18 = vld [vmem:[%s17] sm:$0x1]
    %19 = vrot.lane.b32.xlu0 %v18, 52
    %v20 = vpop.permute.xlu0 %19
    %vm21 = vcmask 458144
    %22 = vst.msk [vmem:[#allocation0] sm:$0x1] %vm21, %v20
    %s23 = scalar_lea.vmem %s0, 12
    %v24 = vld [vmem:[%s23] sm:$0x1]
    %25 = vrot.lane.b32.xlu0 %v24, 48
    %v26 = vpop.permute.xlu0 %25
    %vm27 = vcmask 425344
    %28 = vst.msk [vmem:[#allocation0] sm:$0x1] %vm27, %v26
    %s29 = scalar_lea.vmem %s0, 11
    %v30 = vld [vmem:[%s29] sm:$0x1]
    %31 = vrot.lane.b32.xlu0 %v30, 44
    %v32 = vpop.permute.xlu0 %31
    %vm33 = vcmask 392544
    %34 = vst.msk [vmem:[#allocation0] sm:$0x1] %vm33, %v32
    %s35 = scalar_lea.vmem %s0, 10
    %v36 = vld [vmem:[%s35] sm:$0x1]
    %37 = vrot.lane.b32.xlu0 %v36, 40
    %v38 = vpop.permute.xlu0 %37
    %vm39 = vcmask 359744
    %40 = vst.msk [vmem:[#allocation0] sm:$0x1] %vm39, %v38
    %s41 = scalar_lea.vmem %s0, 9
    %v42 = vld [vmem:[%s41] sm:$0x1]
    %43 = vrot.lane.b32.xlu0 %v42, 36
    %v44 = vpop.permute.xlu0 %43
    %vm45 = vcmask 326944
    %46 = vst.msk [vmem:[#allocation0] sm:$0x1] %vm45, %v44
    %s47 = scalar_lea.vmem %s0, 8
    %v48 = vld [vmem:[%s47] sm:$0x1]
    %49 = vrot.lane.b32.xlu0 %v48, 32
    %v50 = vpop.permute.xlu0 %49
    %vm51 = vcmask 294144
    %52 = vst.msk [vmem:[#allocation0] sm:$0x1] %vm51, %v50
    %s53 = scalar_lea.vmem %s0, 7
    %v54 = vld [vmem:[%s53] sm:$0x1]
    %55 = vrot.lane.b32.xlu0 %v54, 28
    %v56 = vpop.permute.xlu0 %55
    %vm57 = vcmask 261344
    %58 = vst.msk [vmem:[#allocation0] sm:$0x1] %vm57, %v56
    %s59 = scalar_lea.vmem %s0, 6
    %v60 = vld [vmem:[%s59] sm:$0x1]
    %61 = vrot.lane.b32.xlu0 %v60, 24
    %v62 = vpop.permute.xlu0 %61
    %vm63 = vcmask 228544
    %64 = vst.msk [vmem:[#allocation0] sm:$0x1] %vm63, %v62
    %s65 = scalar_lea.vmem %s0, 5
    %v66 = vld [vmem:[%s65] sm:$0x1]
    %67 = vrot.lane.b32.xlu0 %v66, 20
    %v68 = vpop.permute.xlu0 %67
    %vm69 = vcmask 195744
    %70 = vst.msk [vmem:[#allocation0] sm:$0x1] %vm69, %v68
    %s71 = scalar_lea.vmem %s0, 4
    %v72 = vld [vmem:[%s71] sm:$0x1]
    %73 = vrot.lane.b32.xlu0 %v72, 16
    %v74 = vpop.permute.xlu0 %73
    %vm75 = vcmask 162944
    %76 = vst.msk [vmem:[#allocation0] sm:$0x1] %vm75, %v74
    %s77 = scalar_lea.vmem %s0, 3
    %v78 = vld [vmem:[%s77] sm:$0x1]
    %79 = vrot.lane.b32.xlu0 %v78, 12
    %v80 = vpop.permute.xlu0 %79
    %vm81 = vcmask 130144
    %82 = vst.msk [vmem:[#allocation0] sm:$0x1] %vm81, %v80
    %s83 = scalar_lea.vmem %s0, 2
    %v84 = vld [vmem:[%s83] sm:$0x1]
    %85 = vrot.lane.b32.xlu0 %v84, 8
    %v86 = vpop.permute.xlu0 %85
    %vm87 = vcmask 97344
    %88 = vst.msk [vmem:[#allocation0] sm:$0x1] %vm87, %v86
    %s89 = scalar_lea.vmem %s0, 1
    %v90 = vld [vmem:[%s89] sm:$0x1]
    %91 = vrot.lane.b32.xlu0 %v90, 4
    %v92 = vpop.permute.xlu0 %91
    %vm93 = vcmask 64544
    %94 = vst.msk [vmem:[#allocation0] sm:$0x1] %vm93, %v92
    %s96 = sshllo.u32 0, 1
    %v98 = vld [vmem:[#allocation0] sm:%s96]
    %s99 = sshllo.u32 0, 1
    %100 = vst [vmem:[%s1] sm:%s99] %v98

// kernel: tile.53
$region0: #{tile.53}
  #allocation0 [shape = 's32[1]{0}', space=sflag, size = 0x4, scoped, tag = 'scoped memory for tile.53']
  %s0 = inlined_call_operand.vmem [shape: f32[8], index: 0, kind: input, shape index: {}]
  %s1 = inlined_call_operand.vmem [shape: f32[16,8], index: 1, kind: output, shape index: {}]
  // Predicated region
  $region2: #{tile.53} parent=0 // pred_check
    _
  $region3: #{tile.53} parent=0 // pred_check_branch
    %3 = sbr.rel (0) target = $region5
  $region4: #{tile.53} parent=0 // pred_region
    _
  $region5: #{tile.53} parent=0 // pred_fallthru
    _
  %v4 = vld [vmem:[%s0] ss:$0 sm:$0xff]
  %5 = vst [vmem:[%s1] sm:$0xff] %v4
  %s6 = scalar_lea.vmem %s1, 8
  %7 = vst [vmem:[%s6] sm:$0xff] %v4

// kernel: sepconv_forward.3
$region0: #{sepconv_forward.3}
  #allocation0 [shape = 'u32[]', space=smem, size = 0x4, offset = 0x4, fixed_abs, tag = 'smem constant byte address 0x4 - core index']
  #allocation1 [shape = 'u32[144,128]{1,0:T(1,128)}', space=vmem, size = 0x12000, scoped, tag = 'internal scratch']
  #allocation2 [shape = 'f32[18,72]{1,0:T(8,128)}', space=vmem, size = 0x3000, scoped, tag = 'scratch operand']
  %s0 = inlined_call_operand.vmem [shape: f32[2,16,64], index: 0, kind: input, shape index: {}]
  %s1 = inlined_call_operand.vmem [shape: f32[1,64], index: 1, kind: input, shape index: {}]
  %s2 = inlined_call_operand.vmem [shape: f32[1,64], index: 2, kind: input, shape index: {}]
  %s3 = inlined_call_operand.vmem [shape: f32[9,64], index: 3, kind: input, shape index: {}]
  %s4 = inlined_call_operand.vmem [shape: bf16[64,64], index: 4, kind: input, shape index: {}]
  %s5 = inlined_call_operand.vmem [shape: bf16[64,64], index: 5, kind: input, shape index: {}]
  %s6 = inlined_call_operand.vmem [shape: f32[2,16,64], index: 6, kind: output, shape index: {0}]
  %s7 = inlined_call_operand.vmem [shape: f32[2,2,64], index: 7, kind: output, shape index: {1}]
  %8 = xla_tuple %s6, %s7
  %s9 = sld [smem:[#allocation0]]
  $region65: #{sepconv_forward.3} parent=0
    _
  %s11 = ssub.s32 1, %s9
  %s12 = scalar_select 0, %s11, %s9
  loop: start=0, step=1, limit=4
  $region2: #{sepconv_forward.3} parent=0 // loop_pre_header
    _
  $region3: #{sepconv_forward.3} parent=0 // loop_header
    %s14 = sphi 0, %s18
    %p15 = scmp.ge.s32.totalorder %s14, 4
    %s24 = sphi 0, %s26
    %s27 = sphi 0, %s24
    %s28 = sphi 0, %s27
    %s44 = sphi 0, %s28
    %s48 = sphi 0, %s48
    %s50 = sphi 0, %s48
    %s51 = sphi 0, %s50
    %s65 = sphi 0, %s51
    %s69 = sphi 0, %s69
    %s71 = sphi 0, %s69
    %s72 = sphi 0, %s71
    %s86 = sphi 0, %s72
    %s90 = sphi 0, %s90
    %s92 = sphi 0, %s90
    %s93 = sphi 0, %s92
    %s107 = sphi 0, %s93
    %s111 = sphi 0, %s111
    %s113 = sphi 0, %s111
    %s114 = sphi 0, %s113
    %s128 = sphi 0, %s114
    %s132 = sphi 0, %s132
    %s134 = sphi 0, %s132
    %s135 = sphi 0, %s134
    %s149 = sphi 0, %s135
    %s155 = sphi 0, %s157
    %s158 = sphi 0, %s155
    %s159 = sphi 0, %s158
    %s175 = sphi 0, %s159
    %s181 = sphi 0, %s183
    %s184 = sphi 0, %s181
    %s185 = sphi 0, %s184
    %s201 = sphi 0, %s185
  $region4: #{sepconv_forward.3} parent=0 // loop_header_branch
    %17 = sbr.rel (%p15) target = $region8
  $region5: #{sepconv_forward.3} parent=0 // loop_body
    %s19 = ssub.s32 %s14, 1
    %s20 = ssub.s32 %s14, 2
    %s21 = sadd.s32 %s14, 1
    %s22 = ssub.s32 %s14, %s21
    %p23 = scmp.eq.s32.totalorder %s22, 0
    %s25 = sadd.s32 %s24, 1
    %s26 = scalar_select %p23, %s24, %s25
    %p29 = pneg %p23
    %p30 = scmp.eq.s32.totalorder %s14, 1
    %p31 = por %p29, %p30
    %p32 = scmp.ne.s32.totalorder %s24, %s27
    %p33 = scmp.eq.s32.totalorder %s14, 0
    %p34 = por %p32, %p33
    %p35 = scmp.ne.s32.totalorder %s24, %s27
    %p36 = scmp.eq.s32.totalorder %s19, 1
    %p37 = por %p35, %p36
    %p38 = scmp.ne.s32.totalorder %s27, %s28
    %p39 = scmp.eq.s32.totalorder %s19, 0
    %p40 = por %p38, %p39
    %p41 = scmp.ne.s32.totalorder %s27, %s28
    %p42 = scmp.eq.s32.totalorder %s20, 1
    %p43 = por %p41, %p42
    %p45 = scmp.ne.s32.totalorder %s28, %s44
    %p46 = scmp.eq.s32.totalorder %s20, 0
    %p47 = por %p45, %p46
    %s49 = sadd.s32 %s48, 1
    %p52 = scmp.eq.s32.totalorder %s14, 1
    %p53 = scmp.ne.s32.totalorder %s48, %s50
    %p54 = scmp.eq.s32.totalorder %s14, 0
    %p55 = por %p53, %p54
    %p56 = scmp.ne.s32.totalorder %s48, %s50
    %p57 = scmp.eq.s32.totalorder %s19, 1
    %p58 = por %p56, %p57
    %p59 = scmp.ne.s32.totalorder %s50, %s51
    %p60 = scmp.eq.s32.totalorder %s19, 0
    %p61 = por %p59, %p60
    %p62 = scmp.ne.s32.totalorder %s50, %s51
    %p63 = scmp.eq.s32.totalorder %s20, 1
    %p64 = por %p62, %p63
    %p66 = scmp.ne.s32.totalorder %s51, %s65
    %p67 = scmp.eq.s32.totalorder %s20, 0
    %p68 = por %p66, %p67
    %s70 = sadd.s32 %s69, 1
    %p73 = scmp.eq.s32.totalorder %s14, 1
    %p74 = scmp.ne.s32.totalorder %s69, %s71
    %p75 = scmp.eq.s32.totalorder %s14, 0
    %p76 = por %p74, %p75
    %p77 = scmp.ne.s32.totalorder %s69, %s71
    %p78 = scmp.eq.s32.totalorder %s19, 1
    %p79 = por %p77, %p78
    %p80 = scmp.ne.s32.totalorder %s71, %s72
    %p81 = scmp.eq.s32.totalorder %s19, 0
    %p82 = por %p80, %p81
    %p83 = scmp.ne.s32.totalorder %s71, %s72
    %p84 = scmp.eq.s32.totalorder %s20, 1
    %p85 = por %p83, %p84
    %p87 = scmp.ne.s32.totalorder %s72, %s86
    %p88 = scmp.eq.s32.totalorder %s20, 0
    %p89 = por %p87, %p88
    %s91 = sadd.s32 %s90, 1
    %p94 = scmp.eq.s32.totalorder %s14, 1
    %p95 = scmp.ne.s32.totalorder %s90, %s92
    %p96 = scmp.eq.s32.totalorder %s14, 0
    %p97 = por %p95, %p96
    %p98 = scmp.ne.s32.totalorder %s90, %s92
    %p99 = scmp.eq.s32.totalorder %s19, 1
    %p100 = por %p98, %p99
    %p101 = scmp.ne.s32.totalorder %s92, %s93
    %p102 = scmp.eq.s32.totalorder %s19, 0
    %p103 = por %p101, %p102
    %p104 = scmp.ne.s32.totalorder %s92, %s93
    %p105 = scmp.eq.s32.totalorder %s20, 1
    %p106 = por %p104, %p105
    %p108 = scmp.ne.s32.totalorder %s93, %s107
    %p109 = scmp.eq.s32.totalorder %s20, 0
    %p110 = por %p108, %p109
    %s112 = sadd.s32 %s111, 1
    %p115 = scmp.eq.s32.totalorder %s14, 1
    %p116 = scmp.ne.s32.totalorder %s111, %s113
    %p117 = scmp.eq.s32.totalorder %s14, 0
    %p118 = por %p116, %p117
    %p119 = scmp.ne.s32.totalorder %s111, %s113
    %p120 = scmp.eq.s32.totalorder %s19, 1
    %p121 = por %p119, %p120
    %p122 = scmp.ne.s32.totalorder %s113, %s114
    %p123 = scmp.eq.s32.totalorder %s19, 0
    %p124 = por %p122, %p123
    %p125 = scmp.ne.s32.totalorder %s113, %s114
    %p126 = scmp.eq.s32.totalorder %s20, 1
    %p127 = por %p125, %p126
    %p129 = scmp.ne.s32.totalorder %s114, %s128
    %p130 = scmp.eq.s32.totalorder %s20, 0
    %p131 = por %p129, %p130
    %s133 = sadd.s32 %s132, 1
    %p136 = scmp.eq.s32.totalorder %s14, 1
    %p137 = scmp.ne.s32.totalorder %s132, %s134
    %p138 = scmp.eq.s32.totalorder %s14, 0
    %p139 = por %p137, %p138
    %p140 = scmp.ne.s32.totalorder %s132, %s134
    %p141 = scmp.eq.s32.totalorder %s19, 1
    %p142 = por %p140, %p141
    %p143 = scmp.ne.s32.totalorder %s134, %s135
    %p144 = scmp.eq.s32.totalorder %s19, 0
    %p145 = por %p143, %p144
    %p146 = scmp.ne.s32.totalorder %s134, %s135
    %p147 = scmp.eq.s32.totalorder %s20, 1
    %p148 = por %p146, %p147
    %p150 = scmp.ne.s32.totalorder %s135, %s149
    %p151 = scmp.eq.s32.totalorder %s20, 0
    %p152 = por %p150, %p151
    %s153 = ssub.s32 %s14, %s21
    %p154 = scmp.eq.s32.totalorder %s153, 0
    %s156 = sadd.s32 %s155, 1
    %s157 = scalar_select %p154, %s155, %s156
    %p160 = pneg %p154
    %p161 = scmp.eq.s32.totalorder %s14, 1
    %p162 = por %p160, %p161
    %p163 = scmp.ne.s32.totalorder %s155, %s158
    %p164 = scmp.eq.s32.totalorder %s14, 0
    %p165 = por %p163, %p164
    %p166 = scmp.ne.s32.totalorder %s155, %s158
    %p167 = scmp.eq.s32.totalorder %s19, 1
    %p168 = por %p166, %p167
    %p169 = scmp.ne.s32.totalorder %s158, %s159
    %p170 = scmp.eq.s32.totalorder %s19, 0
    %p171 = por %p169, %p170
    %p172 = scmp.ne.s32.totalorder %s158, %s159
    %p173 = scmp.eq.s32.totalorder %s20, 1
    %p174 = por %p172, %p173
    %p176 = scmp.ne.s32.totalorder %s159, %s175
    %p177 = scmp.eq.s32.totalorder %s20, 0
    %p178 = por %p176, %p177
    %s179 = ssub.s32 %s14, %s21
    %p180 = scmp.eq.s32.totalorder %s179, 0
    %s182 = sadd.s32 %s181, 1
    %s183 = scalar_select %p180, %s181, %s182
    %p186 = pneg %p180
    %p187 = scmp.eq.s32.totalorder %s14, 1
    %p188 = por %p186, %p187
    %p189 = scmp.ne.s32.totalorder %s181, %s184
    %p190 = scmp.eq.s32.totalorder %s14, 0
    %p191 = por %p189, %p190
    %p192 = scmp.ne.s32.totalorder %s181, %s184
    %p193 = scmp.eq.s32.totalorder %s19, 1
    %p194 = por %p192, %p193
    %p195 = scmp.ne.s32.totalorder %s184, %s185
    %p196 = scmp.eq.s32.totalorder %s19, 0
    %p197 = por %p195, %p196
    %p198 = scmp.ne.s32.totalorder %s184, %s185
    %p199 = scmp.eq.s32.totalorder %s20, 1
    %p200 = por %p198, %p199
    %p202 = scmp.ne.s32.totalorder %s185, %s201
    %p203 = scmp.eq.s32.totalorder %s20, 0
    %p204 = por %p202, %p203
    %p205 = scmp.le.s32.totalorder 1, %s14
    %p206 = scmp.lt.s32.totalorder %s14, 3
    %p207 = pnand %p205, %p206
    %p208 = pneg %p207
    // Predicated region
    $region9: #{sepconv_forward.3} parent=5 // pred_check
      _
    $region10: #{sepconv_forward.3} parent=5 // pred_check_branch
      %210 = sbr.rel (%p207) target = $region12
    $region11: #{sepconv_forward.3} parent=5 // pred_region
      %s211 = ssub.s32 %s14, 1
      // Predicated region
      $region13: #{sepconv_forward.3} parent=11 // pred_check
        %p212 = pneg %p61
      $region14: #{sepconv_forward.3} parent=11 // pred_check_branch
        %214 = sbr.rel (%p212) target = $region16
      $region15: #{sepconv_forward.3} parent=11 // pred_region
        _
      $region16: #{sepconv_forward.3} parent=11 // pred_fallthru
        _
      // Predicated region
      $region17: #{sepconv_forward.3} parent=11 // pred_check
        %p215 = pneg %p82
      $region18: #{sepconv_forward.3} parent=11 // pred_check_branch
        %217 = sbr.rel (%p215) target = $region20
      $region19: #{sepconv_forward.3} parent=11 // pred_region
        _
      $region20: #{sepconv_forward.3} parent=11 // pred_fallthru
        _
      // Predicated region
      $region21: #{sepconv_forward.3} parent=11 // pred_check
        %p218 = pneg %p103
      $region22: #{sepconv_forward.3} parent=11 // pred_check_branch
        %220 = sbr.rel (%p218) target = $region24
      $region23: #{sepconv_forward.3} parent=11 // pred_region
        _
      $region24: #{sepconv_forward.3} parent=11 // pred_fallthru
        _
      // Predicated region
      $region25: #{sepconv_forward.3} parent=11 // pred_check
        %p221 = pneg %p124
      $region26: #{sepconv_forward.3} parent=11 // pred_check_branch
        %223 = sbr.rel (%p221) target = $region28
      $region27: #{sepconv_forward.3} parent=11 // pred_region
        _
      $region28: #{sepconv_forward.3} parent=11 // pred_fallthru
        _
      // Predicated region
      $region29: #{sepconv_forward.3} parent=11 // pred_check
        %p224 = pneg %p145
      $region30: #{sepconv_forward.3} parent=11 // pred_check_branch
        %226 = sbr.rel (%p224) target = $region32
      $region31: #{sepconv_forward.3} parent=11 // pred_region
        _
      $region32: #{sepconv_forward.3} parent=11 // pred_fallthru
        _
    $region12: #{sepconv_forward.3} parent=5 // pred_fallthru
      _
    %p227 = scmp.lt.s32.totalorder %s14, 2
    // Predicated region
    $region33: #{sepconv_forward.3} parent=5 // pred_check
      %p228 = pneg %p227
    $region34: #{sepconv_forward.3} parent=5 // pred_check_branch
      %230 = sbr.rel (%p228) target = $region36
    $region35: #{sepconv_forward.3} parent=5 // pred_region
      // Predicated region
      $region37: #{sepconv_forward.3} parent=35 // pred_check
        %p231 = pneg %p34
      $region38: #{sepconv_forward.3} parent=35 // pred_check_branch
        %233 = sbr.rel (%p231) target = $region40
      $region39: #{sepconv_forward.3} parent=35 // pred_region
        %p234 = scmp.lt.s32.totalorder %s14, 1
        %s235 = scalar_select %p234, %s14, 1
        %s236 = smul.addr %s235, 2
        %s237 = smul.addr %s236, 8
        %s238 = scalar_lea.vmem %s0, %s237
      $region40: #{sepconv_forward.3} parent=35 // pred_fallthru
        _
    $region36: #{sepconv_forward.3} parent=5 // pred_fallthru
      _
    %p239 = scmp.le.s32.totalorder 1, %s14
    %p240 = scmp.lt.s32.totalorder %s14, 3
    %p241 = pnand %p239, %p240
    %p242 = pneg %p241
    // Predicated region
    $region41: #{sepconv_forward.3} parent=5 // pred_check
      _
    $region42: #{sepconv_forward.3} parent=5 // pred_check_branch
      %244 = sbr.rel (%p241) target = $region44
    $region43: #{sepconv_forward.3} parent=5 // pred_region
      %s245 = ssub.s32 %s14, 1
      %p246 = scmp.lt.s32.totalorder %s19, 1
      %s247 = scalar_select %p246, %s19, 1
      %s248 = smul.addr %s247, 2
      %s249 = smul.addr %s248, 8
      %s250 = scalar_lea.vmem %s0, %s249
      %p251 = pneg %p40
      %p252 = pneg %p37
      %p253 = pneg %p61
      %p254 = pneg %p58
      %p255 = pneg %p82
      %p256 = pneg %p79
      %p257 = pneg %p103
      %p258 = pneg %p100
      %p259 = pneg %p124
      %p260 = pneg %p121
      %p261 = pneg %p145
      %p262 = pneg %p142
      %p263 = pneg %p171
      %p264 = pneg %p168
      %p265 = scmp.lt.s32.totalorder %s19, 1
      %s266 = scalar_select %p265, %s19, 1
      %s267 = smul.addr %s266, 2
      %s268 = smul.addr %s267, 8
      %s269 = scalar_lea.vmem %s6, %s268
      %p270 = pneg %p197
      %p271 = pneg %p194
      %p272 = scmp.lt.s32.totalorder %s19, 1
      %s273 = scalar_select %p272, %s19, 1
      %s274 = smul.addr %s273, 2
      %s275 = scalar_lea.vmem %s7, %s274
      %p276 = scmp.lt.s32.totalorder %s19, 1
      %s277 = scalar_select %p276, %s19, 1
      %s278 = smul.addr %s277, 2
      %s279 = smul.addr %s278, 8
      %s280 = scalar_lea.vmem %s0, %s279
      %p281 = scmp.lt.s32.totalorder %s19, 1
      %s282 = scalar_select %p281, %s19, 1
      %s283 = smul.addr %s282, 2
      %s284 = smul.addr %s283, 8
      %s285 = scalar_lea.vmem %s6, %s284
      %p286 = scmp.lt.s32.totalorder %s19, 1
      %s287 = scalar_select %p286, %s19, 1
      %s288 = smul.addr %s287, 2
      %s289 = scalar_lea.vmem %s7, %s288
      %v291 = vld [vmem:[%s280] sm:$0xff]
      %v292 = vld [vmem:[%s280 + $0x8] sm:$0xff]
      %v293 = vld [vmem:[%s1] sm:$0x1]
      %v295 = vlaneseq
      %v296 = vshrl.u32 %v295, 7
      %v297 = vsub.s32 0, %v296
      %v298 = vrot.slane %v293, %v297
      %v300 = vsub.f32 %v291, %v298
      %v301 = vsub.f32 %v292, %v298
      %v302 = vld [vmem:[%s2] sm:$0x1]
      %v304 = vlaneseq
      %v305 = vshrl.u32 %v304, 7
      %v306 = vsub.s32 0, %v305
      %v307 = vrot.slane %v302, %v306
      %v309 = vmul.f32 %v300, %v307
      %v310 = vmul.f32 %v301, %v307
      %v311 = vmax.f32 %v309, 0.0
      %v312 = vmax.f32 %v310, 0.0
      %vm313 = vcmask 581632
      %314 = vst.msk [vmem:[#allocation2] sm:$0x1] %vm313, 0.0
      %315 = vst.msk [vmem:[#allocation2 + $0x11] sm:$0x1] %vm313, 0.0
      %vm316 = vcmask 31744
      %317 = vst.msk [vmem:[#allocation2 + $0x1] sm:$0xff] %vm316, 0.0
      %318 = vst.msk [vmem:[#allocation2 + $0x9] sm:$0xff] %vm316, 0.0
      %vm319 = vcmask 589344
      %320 = vst.msk [vmem:[#allocation2 + $0x1] sm:$0xff] %vm319, 0.0
      %321 = vst.msk [vmem:[#allocation2 + $0x9] sm:$0xff] %vm319, 0.0
      %324 = vrot.lane.b32.xlu0 %v311, 4
      %v325 = vpop.permute.xlu0 %324
      %326 = vrot.lane.b32.xlu0 %v312, 4
      %v327 = vpop.permute.xlu0 %326
      %vm330 = vcmask 556064
      %331 = vst.msk [vmem:[#allocation2 + $0x1] sm:$0xff] %vm330, %v325
      %332 = vst.msk [vmem:[#allocation2 + $0x9] sm:$0xff] %vm330, %v327
      %v333 = vld [vmem:[#allocation2] sm:$0xff]
      %v334 = vld [vmem:[#allocation2 + $0x8] sm:$0xff]
      %v335 = vld [vmem:[#allocation2 + $0x10] sm:$0x3]
      %v336 = vld [vmem:[%s3] sm:$0xff]
      %v337 = vld [vmem:[%s3 + $0x8] sm:$0x1]
      %v338 = vlaneseq
      %v339 = vshrl.u32 %v338, 7
      %v340 = vsub.s32 0, %v339
      %v341 = vrot.slane %v336, %v340
      %v342 = vmul.f32 %v333, %v341
      %v343 = vmul.f32 %v334, %v341
      %v344 = vadd.f32 %v342, 0.0
      %v345 = vadd.f32 %v343, 0.0
      %v346 = vlaneseq
      %v347 = vshrl.u32 %v346, 7
      %v348 = vsub.s32 1, %v347
      %v349 = vrot.slane %v336, %v348
      %351 = vrot.lane.b32.xlu0 %v349, 4
      %v352 = vpop.permute.xlu0 %351
      %v354 = vmul.f32 %v333, %v352
      %v355 = vmul.f32 %v334, %v352
      %358 = vrot.lane.b32.xlu0 %v354, 124
      %v359 = vpop.permute.xlu0 %358
      %360 = vrot.lane.b32.xlu0 %v355, 124
      %v361 = vpop.permute.xlu0 %360
      %v364 = vadd.f32 %v344, %v359
      %v365 = vadd.f32 %v345, %v361
      %v366 = vlaneseq
      %v367 = vshrl.u32 %v366, 7
      %v368 = vsub.s32 2, %v367
      %v369 = vrot.slane %v336, %v368
      %371 = vrot.lane.b32.xlu0 %v369, 8
      %v372 = vpop.permute.xlu0 %371
      %v374 = vmul.f32 %v333, %v372
      %v375 = vmul.f32 %v334, %v372
      %378 = vrot.lane.b32.xlu0 %v374, 120
      %v379 = vpop.permute.xlu0 %378
      %380 = vrot.lane.b32.xlu0 %v375, 120
      %v381 = vpop.permute.xlu0 %380
      %v384 = vadd.f32 %v364, %v379
      %v385 = vadd.f32 %v365, %v381
      %v386 = vlaneseq
      %v387 = vshrl.u32 %v386, 7
      %v388 = vsub.s32 3, %v387
      %v389 = vrot.slane %v336, %v388
      %v390 = vmul.f32 %v333, %v389
      %v391 = vmul.f32 %v334, %v389
      %v392 = vmul.f32 %v335, %v389
      %vm396 = vcmask 1046528
      %v397 = vrot.slane %v390, 1
      %v398 = vrot.slane %v391, 1
      %v399 = vsel %vm396, %v397, %v398
      %v400 = vrot.slane %v392, 1
      %v401 = vsel %vm396, %v398, %v400
      %v404 = vadd.f32 %v384, %v399
      %v405 = vadd.f32 %v385, %v401
      %v406 = vlaneseq
      %v407 = vshrl.u32 %v406, 7
      %v408 = vsub.s32 4, %v407
      %v409 = vrot.slane %v336, %v408
      %411 = vrot.lane.b32.xlu0 %v409, 4
      %v412 = vpop.permute.xlu0 %411
      %v414 = vmul.f32 %v333, %v412
      %v415 = vmul.f32 %v334, %v412
      %v416 = vmul.f32 %v335, %v412
      %v420 = vrot.slane %v414, 1
      %v421 = vrot.slane %v415, 1
      %v422 = vsel %vm396, %v420, %v421
      %v423 = vrot.slane %v416, 1
      %v424 = vsel %vm396, %v421, %v423
      %425 = vrot.lane.b32.xlu0 %v422, 124
      %v426 = vpop.permute.xlu0 %425
      %427 = vrot.lane.b32.xlu0 %v424, 124
      %v428 = vpop.permute.xlu0 %427
      %v431 = vadd.f32 %v404, %v426
      %v432 = vadd.f32 %v405, %v428
      %v433 = vlaneseq
      %v434 = vshrl.u32 %v433, 7
      %v435 = vsub.s32 5, %v434
      %v436 = vrot.slane %v336, %v435
      %438 = vrot.lane.b32.xlu0 %v436, 8
      %v439 = vpop.permute.xlu0 %438
      %v441 = vmul.f32 %v333, %v439
      %v442 = vmul.f32 %v334, %v439
      %v443 = vmul.f32 %v335, %v439
      %v447 = vrot.slane %v441, 1
      %v448 = vrot.slane %v442, 1
      %v449 = vsel %vm396, %v447, %v448
      %v450 = vrot.slane %v443, 1
      %v451 = vsel %vm396, %v448, %v450
      %452 = vrot.lane.b32.xlu0 %v449, 120
      %v453 = vpop.permute.xlu0 %452
      %454 = vrot.lane.b32.xlu0 %v451, 120
      %v455 = vpop.permute.xlu0 %454
      %v458 = vadd.f32 %v431, %v453
      %v459 = vadd.f32 %v432, %v455
      %v460 = vlaneseq
      %v461 = vshrl.u32 %v460, 7
      %v462 = vsub.s32 6, %v461
      %v463 = vrot.slane %v336, %v462
      %v464 = vmul.f32 %v333, %v463
      %v465 = vmul.f32 %v334, %v463
      %v466 = vmul.f32 %v335, %v463
      %vm470 = vcmask 1045504
      %v471 = vrot.slane %v464, 2
      %v472 = vrot.slane %v465, 2
      %v473 = vsel %vm470, %v471, %v472
      %v474 = vrot.slane %v466, 2
      %v475 = vsel %vm470, %v472, %v474
      %v478 = vadd.f32 %v458, %v473
      %v479 = vadd.f32 %v459, %v475
      %v480 = vlaneseq
      %v481 = vshrl.u32 %v480, 7
      %v482 = vsub.s32 7, %v481
      %v483 = vrot.slane %v336, %v482
      %485 = vrot.lane.b32.xlu0 %v483, 4
      %v486 = vpop.permute.xlu0 %485
      %v488 = vmul.f32 %v333, %v486
      %v489 = vmul.f32 %v334, %v486
      %v490 = vmul.f32 %v335, %v486
      %v494 = vrot.slane %v488, 2
      %v495 = vrot.slane %v489, 2
      %v496 = vsel %vm470, %v494, %v495
      %v497 = vrot.slane %v490, 2
      %v498 = vsel %vm470, %v495, %v497
      %499 = vrot.lane.b32.xlu0 %v496, 124
      %v500 = vpop.permute.xlu0 %499
      %501 = vrot.lane.b32.xlu0 %v498, 124
      %v502 = vpop.permute.xlu0 %501
      %v505 = vadd.f32 %v478, %v500
      %v506 = vadd.f32 %v479, %v502
      %v507 = vlaneseq
      %v508 = vshrl.u32 %v507, 7
      %v509 = vsub.s32 0, %v508
      %v510 = vrot.slane %v337, %v509
      %512 = vrot.lane.b32.xlu0 %v510, 8
      %v513 = vpop.permute.xlu0 %512
      %v515 = vmul.f32 %v333, %v513
      %v516 = vmul.f32 %v334, %v513
      %v517 = vmul.f32 %v335, %v513
      %v521 = vrot.slane %v515, 2
      %v522 = vrot.slane %v516, 2
      %v523 = vsel %vm470, %v521, %v522
      %v524 = vrot.slane %v517, 2
      %v525 = vsel %vm470, %v522, %v524
      %526 = vrot.lane.b32.xlu0 %v523, 120
      %v527 = vpop.permute.xlu0 %526
      %528 = vrot.lane.b32.xlu0 %v525, 120
      %v529 = vpop.permute.xlu0 %528
      %v532 = vadd.f32 %v505, %v527
      %v533 = vadd.f32 %v506, %v529
      %v534 = vpack.c.bf16 %v533, %v532
      %v535 = vld [vmem:[%s4] sm:$0xf]
      %v536 = vld [vmem:[%s4 + $0x4] sm:$0xf]
      %v537 = vld [vmem:[%s4 + $0x8] sm:$0xf]
      %v538 = vld [vmem:[%s4 + $0xc] sm:$0xf]
      %v539 = vld [vmem:[%s4 + $0x10] sm:$0xf]
      %v540 = vld [vmem:[%s4 + $0x14] sm:$0xf]
      %v541 = vld [vmem:[%s4 + $0x18] sm:$0xf]
      %v542 = vld [vmem:[%s4 + $0x1c] sm:$0xf]
      %v543 = vunpack.c.l.bf16 %v534
      %v544 = vunpack.c.h.bf16 %v534
      %v545 = vsub.f32 %v532, %v543
      %v546 = vsub.f32 %v533, %v544
      %v547 = vpack.c.bf16 %v546, %v545
      %v556 = vunpack.c.l.b16 %v535
      %v557 = vunpack.c.l.b16 %v536
      %v558 = vunpack.c.l.b16 %v537
      %v559 = vunpack.c.l.b16 %v538
      %v560 = vunpack.c.l.b16 %v539
      %v561 = vunpack.c.l.b16 %v540
      %v562 = vunpack.c.l.b16 %v541
      %v563 = vunpack.c.l.b16 %v542
      %v564 = vpack.c.b16 %v557, %v556
      %v565 = vpack.c.b16 %v559, %v558
      %v566 = vpack.c.b16 %v561, %v560
      %v567 = vpack.c.b16 %v563, %v562
      %vm572 = vcmask 523264
      %v574 = vsel %vm572, %v547, 0
      %576 = vmatprep.subr.bf16.mxu0 0
      %577 = vmatpush1.bf16.msra.mxu0 %v564
      %578 = vmatprep.subr.bf16.mxu0 0
      %579 = vmatpush1.bf16.msra.mxu0 %v565
      %580 = vmatprep.subr.bf16.mxu0 0
      %581 = vmatpush1.bf16.msra.mxu0 %v566
      %582 = vmatprep.subr.bf16.mxu0 0
      %583 = vmatpush1.bf16.msra.mxu0 %v567
      %584 = vmatprep.subr.bf16.mxu0 0
      %585 = vmatpush1.bf16.msra.mxu0 0
      %586 = vmatprep.subr.bf16.mxu0 0
      %587 = vmatpush1.bf16.msra.mxu0 0
      %588 = vmatprep.subr.bf16.mxu0 0
      %589 = vmatpush1.bf16.msra.mxu0 0
      %590 = vmatprep.subr.bf16.mxu0 0
      %591 = vmatpush1.bf16.msra.mxu0 0
      %592 = vmatprep.subr.bf16.mxu0 0
      %593 = vmatpush1.bf16.msra.mxu0 0
      %594 = vmatprep.subr.bf16.mxu0 0
      %595 = vmatpush1.bf16.msra.mxu0 0
      %596 = vmatprep.subr.bf16.mxu0 0
      %597 = vmatpush1.bf16.msra.mxu0 0
      %598 = vmatprep.subr.bf16.mxu0 0
      %599 = vmatpush1.bf16.msra.mxu0 0
      %600 = vmatprep.subr.bf16.mxu0 0
      %601 = vmatpush1.bf16.msra.mxu0 0
      %602 = vmatprep.subr.bf16.mxu0 0
      %603 = vmatpush1.bf16.msra.mxu0 0
      %604 = vmatprep.subr.bf16.mxu0 0
      %605 = vmatpush1.bf16.msra.mxu0 0
      %606 = vmatprep.subr.bf16.mxu0 0
      %607 = vmatpush1.bf16.msra.mxu0 0
      %608 = vmatprep.mubr.bf16.mxu0 0
      %609 = vmatmul.mubr.bf16.gmra.mrb[0].mxu0 %v574
      %v610 = vpop.f32.mrb[0].mxu0
      %v611 = vadd.f32 0.0, %v610
      %v612 = vpop.f32.mrb[0].mxu0
      %v613 = vpop.f32.mrb[0].mxu0
      %v614 = vadd.f32 0.0, %v613
      %v615 = vpop.f32.mrb[0].mxu0
      %616 = vdwg.mxu0
      %v618 = vsel %vm572, %v534, 0
      %620 = vmatprep.subr.bf16.mxu0 0
      %621 = vmatpush1.bf16.msra.mxu0 %v564
      %622 = vmatprep.subr.bf16.mxu0 0
      %623 = vmatpush1.bf16.msra.mxu0 %v565
      %624 = vmatprep.subr.bf16.mxu0 0
      %625 = vmatpush1.bf16.msra.mxu0 %v566
      %626 = vmatprep.subr.bf16.mxu0 0
      %627 = vmatpush1.bf16.msra.mxu0 %v567
      %628 = vmatprep.subr.bf16.mxu0 0
      %629 = vmatpush1.bf16.msra.mxu0 0
      %630 = vmatprep.subr.bf16.mxu0 0
      %631 = vmatpush1.bf16.msra.mxu0 0
      %632 = vmatprep.subr.bf16.mxu0 0
      %633 = vmatpush1.bf16.msra.mxu0 0
      %634 = vmatprep.subr.bf16.mxu0 0
      %635 = vmatpush1.bf16.msra.mxu0 0
      %636 = vmatprep.subr.bf16.mxu0 0
      %637 = vmatpush1.bf16.msra.mxu0 0
      %638 = vmatprep.subr.bf16.mxu0 0
      %639 = vmatpush1.bf16.msra.mxu0 0
      %640 = vmatprep.subr.bf16.mxu0 0
      %641 = vmatpush1.bf16.msra.mxu0 0
      %642 = vmatprep.subr.bf16.mxu0 0
      %643 = vmatpush1.bf16.msra.mxu0 0
      %644 = vmatprep.subr.bf16.mxu0 0
      %645 = vmatpush1.bf16.msra.mxu0 0
      %646 = vmatprep.subr.bf16.mxu0 0
      %647 = vmatpush1.bf16.msra.mxu0 0
      %648 = vmatprep.subr.bf16.mxu0 0
      %649 = vmatpush1.bf16.msra.mxu0 0
      %650 = vmatprep.subr.bf16.mxu0 0
      %651 = vmatpush1.bf16.msra.mxu0 0
      %652 = vmatprep.mubr.bf16.mxu0 0
      %653 = vmatmul.mubr.bf16.gmra.mrb[0].mxu0 %v618
      %v654 = vpop.f32.mrb[0].mxu0
      %v655 = vadd.f32 %v611, %v654
      %v656 = vpop.f32.mrb[0].mxu0
      %v657 = vpop.f32.mrb[0].mxu0
      %v658 = vadd.f32 %v614, %v657
      %v659 = vpop.f32.mrb[0].mxu0
      %660 = vdwg.mxu0
      %v661 = vld [vmem:[%s5] sm:$0xf]
      %v662 = vld [vmem:[%s5 + $0x4] sm:$0xf]
      %v663 = vld [vmem:[%s5 + $0x8] sm:$0xf]
      %v664 = vld [vmem:[%s5 + $0xc] sm:$0xf]
      %v665 = vld [vmem:[%s5 + $0x10] sm:$0xf]
      %v666 = vld [vmem:[%s5 + $0x14] sm:$0xf]
      %v667 = vld [vmem:[%s5 + $0x18] sm:$0xf]
      %v668 = vld [vmem:[%s5 + $0x1c] sm:$0xf]
      %v677 = vunpack.c.l.b16 %v661
      %v678 = vunpack.c.l.b16 %v662
      %v679 = vunpack.c.l.b16 %v663
      %v680 = vunpack.c.l.b16 %v664
      %v681 = vunpack.c.l.b16 %v665
      %v682 = vunpack.c.l.b16 %v666
      %v683 = vunpack.c.l.b16 %v667
      %v684 = vunpack.c.l.b16 %v668
      %v685 = vpack.c.b16 %v678, %v677
      %v686 = vpack.c.b16 %v680, %v679
      %v687 = vpack.c.b16 %v682, %v681
      %v688 = vpack.c.b16 %v684, %v683
      %693 = vmatprep.subr.bf16.mxu0 0
      %694 = vmatpush1.bf16.msra.mxu0 %v685
      %695 = vmatprep.subr.bf16.mxu0 0
      %696 = vmatpush1.bf16.msra.mxu0 %v686
      %697 = vmatprep.subr.bf16.mxu0 0
      %698 = vmatpush1.bf16.msra.mxu0 %v687
      %699 = vmatprep.subr.bf16.mxu0 0
      %700 = vmatpush1.bf16.msra.mxu0 %v688
      %701 = vmatprep.subr.bf16.mxu0 0
      %702 = vmatpush1.bf16.msra.mxu0 0
      %703 = vmatprep.subr.bf16.mxu0 0
      %704 = vmatpush1.bf16.msra.mxu0 0
      %705 = vmatprep.subr.bf16.mxu0 0
      %706 = vmatpush1.bf16.msra.mxu0 0
      %707 = vmatprep.subr.bf16.mxu0 0
      %708 = vmatpush1.bf16.msra.mxu0 0
      %709 = vmatprep.subr.bf16.mxu0 0
      %710 = vmatpush1.bf16.msra.mxu0 0
      %711 = vmatprep.subr.bf16.mxu0 0
      %712 = vmatpush1.bf16.msra.mxu0 0
      %713 = vmatprep.subr.bf16.mxu0 0
      %714 = vmatpush1.bf16.msra.mxu0 0
      %715 = vmatprep.subr.bf16.mxu0 0
      %716 = vmatpush1.bf16.msra.mxu0 0
      %717 = vmatprep.subr.bf16.mxu0 0
      %718 = vmatpush1.bf16.msra.mxu0 0
      %719 = vmatprep.subr.bf16.mxu0 0
      %720 = vmatpush1.bf16.msra.mxu0 0
      %721 = vmatprep.subr.bf16.mxu0 0
      %722 = vmatpush1.bf16.msra.mxu0 0
      %723 = vmatprep.subr.bf16.mxu0 0
      %724 = vmatpush1.bf16.msra.mxu0 0
      %725 = vmatprep.mubr.bf16.mxu0 0
      %726 = vmatmul.mubr.bf16.gmra.mrb[0].mxu0 %v618
      %v727 = vpop.f32.mrb[0].mxu0
      %v728 = vadd.f32 0.0, %v727
      %v729 = vpop.f32.mrb[0].mxu0
      %v730 = vpop.f32.mrb[0].mxu0
      %v731 = vadd.f32 0.0, %v730
      %v732 = vpop.f32.mrb[0].mxu0
      %733 = vdwg.mxu0
      %v734 = vadd.f32 %v655, %v728
      %v735 = vadd.f32 %v658, %v731
      %736 = vst.msk [vmem:[%s285] sm:$0xff] %vm572, %v734
      %737 = vst.msk [vmem:[%s285 + $0x8] sm:$0xff] %vm572, %v735
      %v738 = vsel %vm572, %v734, 0.0
      %v739 = vsel %vm572, %v735, 0.0
      %v740 = vadd.f32 %v738, %v739
      %v741 = vrot.slane %v740, 4
      %v742 = vadd.f32 %v740, %v741
      %v743 = vrot.slane %v742, 2
      %v744 = vadd.f32 %v742, %v743
      %v745 = vrot.slane %v744, 1
      %v746 = vadd.f32 %v744, %v745
      %vm747 = vcmask 516096
      %748 = vst.msk [vmem:[%s289] sm:$0x1] %vm747, %v746
      %v749 = vmul.f32 %v734, %v734
      %v750 = vmul.f32 %v735, %v735
      %v751 = vsel %vm572, %v749, 0.0
      %v752 = vsel %vm572, %v750, 0.0
      %v753 = vadd.f32 %v751, %v752
      %v754 = vrot.slane %v753, 4
      %v755 = vadd.f32 %v753, %v754
      %v756 = vrot.slane %v755, 2
      %v757 = vadd.f32 %v755, %v756
      %v758 = vrot.slane %v757, 1
      %v759 = vadd.f32 %v757, %v758
      %760 = vst.msk [vmem:[%s289 + $0x1] sm:$0x1] %vm747, %v759
      %p761 = scmp.lt.s32.totalorder %s19, 1
      %s762 = scalar_select %p761, %s19, 1
      %s763 = smul.addr %s762, 2
      %s764 = smul.addr %s763, 8
      %s765 = scalar_lea.vmem %s6, %s764
      %p766 = scmp.lt.s32.totalorder %s19, 1
      %s767 = scalar_select %p766, %s19, 1
      %s768 = smul.addr %s767, 2
      %s769 = scalar_lea.vmem %s7, %s768
      // Predicated region
      $region45: #{sepconv_forward.3} parent=43 // pred_check
        %p770 = pneg %p168
      $region46: #{sepconv_forward.3} parent=43 // pred_check_branch
        %772 = sbr.rel (%p770) target = $region48
      $region47: #{sepconv_forward.3} parent=43 // pred_region
        _
      $region48: #{sepconv_forward.3} parent=43 // pred_fallthru
        _
      // Predicated region
      $region49: #{sepconv_forward.3} parent=43 // pred_check
        %p773 = pneg %p194
      $region50: #{sepconv_forward.3} parent=43 // pred_check_branch
        %775 = sbr.rel (%p773) target = $region52
      $region51: #{sepconv_forward.3} parent=43 // pred_region
        _
      $region52: #{sepconv_forward.3} parent=43 // pred_fallthru
        _
    $region44: #{sepconv_forward.3} parent=5 // pred_fallthru
      _
    %p776 = scmp.le.s32.totalorder 2, %s14
    // Predicated region
    $region53: #{sepconv_forward.3} parent=5 // pred_check
      %p777 = pneg %p776
    $region54: #{sepconv_forward.3} parent=5 // pred_check_branch
      %779 = sbr.rel (%p777) target = $region56
    $region55: #{sepconv_forward.3} parent=5 // pred_region
      %s780 = ssub.s32 %s14, 2
      // Predicated region
      $region57: #{sepconv_forward.3} parent=55 // pred_check
        %p781 = pneg %p174
      $region58: #{sepconv_forward.3} parent=55 // pred_check_branch
        %783 = sbr.rel (%p781) target = $region60
      $region59: #{sepconv_forward.3} parent=55 // pred_region
        %p784 = scmp.lt.s32.totalorder %s20, 1
        %s785 = scalar_select %p784, %s20, 1
        %s786 = smul.addr %s785, 2
        %s787 = smul.addr %s786, 8
        %s788 = scalar_lea.vmem %s6, %s787
      $region60: #{sepconv_forward.3} parent=55 // pred_fallthru
        _
      // Predicated region
      $region61: #{sepconv_forward.3} parent=55 // pred_check
        %p789 = pneg %p200
      $region62: #{sepconv_forward.3} parent=55 // pred_check_branch
        %791 = sbr.rel (%p789) target = $region64
      $region63: #{sepconv_forward.3} parent=55 // pred_region
        %p792 = scmp.lt.s32.totalorder %s20, 1
        %s793 = scalar_select %p792, %s20, 1
        %s794 = smul.addr %s793, 2
        %s795 = scalar_lea.vmem %s7, %s794
      $region64: #{sepconv_forward.3} parent=55 // pred_fallthru
        _
    $region56: #{sepconv_forward.3} parent=5 // pred_fallthru
      _
  $region6: #{sepconv_forward.3} parent=0 // loop_footer
    %s18 = sadd.s32 1, %s14
  $region7: #{sepconv_forward.3} parent=0 // loop_footer_branch
    %13 = sbr.rel target = $region3
  $region8: #{sepconv_forward.3} parent=0 // loop_exit
    _

// kernel: tile.54
$region0: #{tile.54}
  %s0 = inlined_call_operand.vmem [shape: f32[16,8], index: 0, kind: input, shape index: {}]
  %s1 = inlined_call_operand.vmem [shape: f32[1,128], index: 1, kind: output, shape index: {}]
  $region1: #{tile.54} parent=0
    #allocation0 [shape = 'u8[4096]{0}', space=vmem, size = 0x1000, scoped, tag = 'scoped mem for output reshape']
    %v2 = vld [vmem:[%s0] sm:$0x1]
    %vm3 = vcmask 64512
    %4 = vst.msk [vmem:[#allocation0] sm:$0x1] %vm3, %v2
    %s5 = scalar_lea.vmem %s0, 15
    %v6 = vld [vmem:[%s5] sm:$0x1]
    %7 = vrot.lane.b32.xlu0 %v6, 120
    %v8 = vpop.permute.xlu0 %7
    %vm9 = vcmask 1048512
    %10 = vst.msk [vmem:[#allocation0] sm:$0x1] %vm9, %v8
    %s11 = scalar_lea.vmem %s0, 14
    %v12 = vld [vmem:[%s11] sm:$0x1]
    %13 = vrot.lane.b32.xlu0 %v12, 112
    %v14 = vpop.permute.xlu0 %13
    %vm15 = vcmask 982912
    %16 = vst.msk [vmem:[#allocation0] sm:$0x1] %vm15, %v14
    %s17 = scalar_lea.vmem %s0, 13
    %v18 = vld [vmem:[%s17] sm:$0x1]
    %19 = vrot.lane.b32.xlu0 %v18, 104
    %v20 = vpop.permute.xlu0 %19
    %vm21 = vcmask 917312
    %22 = vst.msk [vmem:[#allocation0] sm:$0x1] %vm21, %v20
    %s23 = scalar_lea.vmem %s0, 12
    %v24 = vld [vmem:[%s23] sm:$0x1]
    %25 = vrot.lane.b32.xlu0 %v24, 96
    %v26 = vpop.permute.xlu0 %25
    %vm27 = vcmask 851712
    %28 = vst.msk [vmem:[#allocation0] sm:$0x1] %vm27, %v26
    %s29 = scalar_lea.vmem %s0, 11
    %v30 = vld [vmem:[%s29] sm:$0x1]
    %31 = vrot.lane.b32.xlu0 %v30, 88
    %v32 = vpop.permute.xlu0 %31
    %vm33 = vcmask 786112
    %34 = vst.msk [vmem:[#allocation0] sm:$0x1] %vm33, %v32
    %s35 = scalar_lea.vmem %s0, 10
    %v36 = vld [vmem:[%s35] sm:$0x1]
    %37 = vrot.lane.b32.xlu0 %v36, 80
    %v38 = vpop.permute.xlu0 %37
    %vm39 = vcmask 720512
    %40 = vst.msk [vmem:[#allocation0] sm:$0x1] %vm39, %v38
    %s41 = scalar_lea.vmem %s0, 9
    %v42 = vld [vmem:[%s41] sm:$0x1]
    %43 = vrot.lane.b32.xlu0 %v42, 72
    %v44 = vpop.permute.xlu0 %43
    %vm45 = vcmask 654912
    %46 = vst.msk [vmem:[#allocation0] sm:$0x1] %vm45, %v44
    %s47 = scalar_lea.vmem %s0, 8
    %v48 = vld [vmem:[%s47] sm:$0x1]
    %49 = vrot.lane.b32.xlu0 %v48, 64
    %v50 = vpop.permute.xlu0 %49
    %vm51 = vcmask 589312
    %52 = vst.msk [vmem:[#allocation0] sm:$0x1] %vm51, %v50
    %s53 = scalar_lea.vmem %s0, 7
    %v54 = vld [vmem:[%s53] sm:$0x1]
    %55 = vrot.lane.b32.xlu0 %v54, 56
    %v56 = vpop.permute.xlu0 %55
    %vm57 = vcmask 523712
    %58 = vst.msk [vmem:[#allocation0] sm:$0x1] %vm57, %v56
    %s59 = scalar_lea.vmem %s0, 6
    %v60 = vld [vmem:[%s59] sm:$0x1]
    %61 = vrot.lane.b32.xlu0 %v60, 48
    %v62 = vpop.permute.xlu0 %61
    %vm63 = vcmask 458112
    %64 = vst.msk [vmem:[#allocation0] sm:$0x1] %vm63, %v62
    %s65 = scalar_lea.vmem %s0, 5
    %v66 = vld [vmem:[%s65] sm:$0x1]
    %67 = vrot.lane.b32.xlu0 %v66, 40
    %v68 = vpop.permute.xlu0 %67
    %vm69 = vcmask 392512
    %70 = vst.msk [vmem:[#allocation0] sm:$0x1] %vm69, %v68
    %s71 = scalar_lea.vmem %s0, 4
    %v72 = vld [vmem:[%s71] sm:$0x1]
    %73 = vrot.lane.b32.xlu0 %v72, 32
    %v74 = vpop.permute.xlu0 %73
    %vm75 = vcmask 326912
    %76 = vst.msk [vmem:[#allocation0] sm:$0x1] %vm75, %v74
    %s77 = scalar_lea.vmem %s0, 3
    %v78 = vld [vmem:[%s77] sm:$0x1]
    %79 = vrot.lane.b32.xlu0 %v78, 24
    %v80 = vpop.permute.xlu0 %79
    %vm81 = vcmask 261312
    %82 = vst.msk [vmem:[#allocation0] sm:$0x1] %vm81, %v80
    %s83 = scalar_lea.vmem %s0, 2
    %v84 = vld [vmem:[%s83] sm:$0x1]
    %85 = vrot.lane.b32.xlu0 %v84, 16
    %v86 = vpop.permute.xlu0 %85
    %vm87 = vcmask 195712
    %88 = vst.msk [vmem:[#allocation0] sm:$0x1] %vm87, %v86
    %s89 = scalar_lea.vmem %s0, 1
    %v90 = vld [vmem:[%s89] sm:$0x1]
    %91 = vrot.lane.b32.xlu0 %v90, 8
    %v92 = vpop.permute.xlu0 %91
    %vm93 = vcmask 130112
    %94 = vst.msk [vmem:[#allocation0] sm:$0x1] %vm93, %v92
    %s96 = sshllo.u32 0, 1
    %v98 = vld [vmem:[#allocation0] sm:%s96]
    %s99 = sshllo.u32 0, 1
    %100 = vst [vmem:[%s1] sm:%s99] %v98

// kernel: sepconv_forward.4
$region0: #{sepconv_forward.4}
  #allocation0 [shape = 'u32[]', space=smem, size = 0x4, offset = 0x4, fixed_abs, tag = 'smem constant byte address 0x4 - core index']
  #allocation1 [shape = 'u32[144,128]{1,0:T(1,128)}', space=vmem, size = 0x12000, scoped, tag = 'internal scratch']
  #allocation2 [shape = 'f32[18,72]{1,0:T(8,128)}', space=vmem, size = 0x3000, scoped, tag = 'scratch operand']
  %s0 = inlined_call_operand.vmem [shape: f32[2,16,64], index: 0, kind: input, shape index: {}]
  %s1 = inlined_call_operand.vmem [shape: f32[1,64], index: 1, kind: input, shape index: {}]
  %s2 = inlined_call_operand.vmem [shape: f32[1,64], index: 2, kind: input, shape index: {}]
  %s3 = inlined_call_operand.vmem [shape: f32[9,64], index: 3, kind: input, shape index: {}]
  %s4 = inlined_call_operand.vmem [shape: bf16[64,128], index: 4, kind: input, shape index: {}]
  %s5 = inlined_call_operand.vmem [shape: bf16[64,128], index: 5, kind: input, shape index: {}]
  %s6 = inlined_call_operand.vmem [shape: f32[2,16,128], index: 6, kind: output, shape index: {0}]
  %s7 = inlined_call_operand.vmem [shape: f32[2,2,128], index: 7, kind: output, shape index: {1}]
  %8 = xla_tuple %s6, %s7
  %s9 = sld [smem:[#allocation0]]
  $region65: #{sepconv_forward.4} parent=0
    _
  %s11 = ssub.s32 1, %s9
  %s12 = scalar_select 0, %s11, %s9
  loop: start=0, step=1, limit=4
  $region2: #{sepconv_forward.4} parent=0 // loop_pre_header
    _
  $region3: #{sepconv_forward.4} parent=0 // loop_header
    %s14 = sphi 0, %s18
    %p15 = scmp.ge.s32.totalorder %s14, 4
    %s24 = sphi 0, %s26
    %s27 = sphi 0, %s24
    %s28 = sphi 0, %s27
    %s44 = sphi 0, %s28
    %s48 = sphi 0, %s48
    %s50 = sphi 0, %s48
    %s51 = sphi 0, %s50
    %s65 = sphi 0, %s51
    %s69 = sphi 0, %s69
    %s71 = sphi 0, %s69
    %s72 = sphi 0, %s71
    %s86 = sphi 0, %s72
    %s90 = sphi 0, %s90
    %s92 = sphi 0, %s90
    %s93 = sphi 0, %s92
    %s107 = sphi 0, %s93
    %s111 = sphi 0, %s111
    %s113 = sphi 0, %s111
    %s114 = sphi 0, %s113
    %s128 = sphi 0, %s114
    %s132 = sphi 0, %s132
    %s134 = sphi 0, %s132
    %s135 = sphi 0, %s134
    %s149 = sphi 0, %s135
    %s155 = sphi 0, %s157
    %s158 = sphi 0, %s155
    %s159 = sphi 0, %s158
    %s175 = sphi 0, %s159
    %s181 = sphi 0, %s183
    %s184 = sphi 0, %s181
    %s185 = sphi 0, %s184
    %s201 = sphi 0, %s185
  $region4: #{sepconv_forward.4} parent=0 // loop_header_branch
    %17 = sbr.rel (%p15) target = $region8
  $region5: #{sepconv_forward.4} parent=0 // loop_body
    %s19 = ssub.s32 %s14, 1
    %s20 = ssub.s32 %s14, 2
    %s21 = sadd.s32 %s14, 1
    %s22 = ssub.s32 %s14, %s21
    %p23 = scmp.eq.s32.totalorder %s22, 0
    %s25 = sadd.s32 %s24, 1
    %s26 = scalar_select %p23, %s24, %s25
    %p29 = pneg %p23
    %p30 = scmp.eq.s32.totalorder %s14, 1
    %p31 = por %p29, %p30
    %p32 = scmp.ne.s32.totalorder %s24, %s27
    %p33 = scmp.eq.s32.totalorder %s14, 0
    %p34 = por %p32, %p33
    %p35 = scmp.ne.s32.totalorder %s24, %s27
    %p36 = scmp.eq.s32.totalorder %s19, 1
    %p37 = por %p35, %p36
    %p38 = scmp.ne.s32.totalorder %s27, %s28
    %p39 = scmp.eq.s32.totalorder %s19, 0
    %p40 = por %p38, %p39
    %p41 = scmp.ne.s32.totalorder %s27, %s28
    %p42 = scmp.eq.s32.totalorder %s20, 1
    %p43 = por %p41, %p42
    %p45 = scmp.ne.s32.totalorder %s28, %s44
    %p46 = scmp.eq.s32.totalorder %s20, 0
    %p47 = por %p45, %p46
    %s49 = sadd.s32 %s48, 1
    %p52 = scmp.eq.s32.totalorder %s14, 1
    %p53 = scmp.ne.s32.totalorder %s48, %s50
    %p54 = scmp.eq.s32.totalorder %s14, 0
    %p55 = por %p53, %p54
    %p56 = scmp.ne.s32.totalorder %s48, %s50
    %p57 = scmp.eq.s32.totalorder %s19, 1
    %p58 = por %p56, %p57
    %p59 = scmp.ne.s32.totalorder %s50, %s51
    %p60 = scmp.eq.s32.totalorder %s19, 0
    %p61 = por %p59, %p60
    %p62 = scmp.ne.s32.totalorder %s50, %s51
    %p63 = scmp.eq.s32.totalorder %s20, 1
    %p64 = por %p62, %p63
    %p66 = scmp.ne.s32.totalorder %s51, %s65
    %p67 = scmp.eq.s32.totalorder %s20, 0
    %p68 = por %p66, %p67
    %s70 = sadd.s32 %s69, 1
    %p73 = scmp.eq.s32.totalorder %s14, 1
    %p74 = scmp.ne.s32.totalorder %s69, %s71
    %p75 = scmp.eq.s32.totalorder %s14, 0
    %p76 = por %p74, %p75
    %p77 = scmp.ne.s32.totalorder %s69, %s71
    %p78 = scmp.eq.s32.totalorder %s19, 1
    %p79 = por %p77, %p78
    %p80 = scmp.ne.s32.totalorder %s71, %s72
    %p81 = scmp.eq.s32.totalorder %s19, 0
    %p82 = por %p80, %p81
    %p83 = scmp.ne.s32.totalorder %s71, %s72
    %p84 = scmp.eq.s32.totalorder %s20, 1
    %p85 = por %p83, %p84
    %p87 = scmp.ne.s32.totalorder %s72, %s86
    %p88 = scmp.eq.s32.totalorder %s20, 0
    %p89 = por %p87, %p88
    %s91 = sadd.s32 %s90, 1
    %p94 = scmp.eq.s32.totalorder %s14, 1
    %p95 = scmp.ne.s32.totalorder %s90, %s92
    %p96 = scmp.eq.s32.totalorder %s14, 0
    %p97 = por %p95, %p96
    %p98 = scmp.ne.s32.totalorder %s90, %s92
    %p99 = scmp.eq.s32.totalorder %s19, 1
    %p100 = por %p98, %p99
    %p101 = scmp.ne.s32.totalorder %s92, %s93
    %p102 = scmp.eq.s32.totalorder %s19, 0
    %p103 = por %p101, %p102
    %p104 = scmp.ne.s32.totalorder %s92, %s93
    %p105 = scmp.eq.s32.totalorder %s20, 1
    %p106 = por %p104, %p105
    %p108 = scmp.ne.s32.totalorder %s93, %s107
    %p109 = scmp.eq.s32.totalorder %s20, 0
    %p110 = por %p108, %p109
    %s112 = sadd.s32 %s111, 1
    %p115 = scmp.eq.s32.totalorder %s14, 1
    %p116 = scmp.ne.s32.totalorder %s111, %s113
    %p117 = scmp.eq.s32.totalorder %s14, 0
    %p118 = por %p116, %p117
    %p119 = scmp.ne.s32.totalorder %s111, %s113
    %p120 = scmp.eq.s32.totalorder %s19, 1
    %p121 = por %p119, %p120
    %p122 = scmp.ne.s32.totalorder %s113, %s114
    %p123 = scmp.eq.s32.totalorder %s19, 0
    %p124 = por %p122, %p123
    %p125 = scmp.ne.s32.totalorder %s113, %s114
    %p126 = scmp.eq.s32.totalorder %s20, 1
    %p127 = por %p125, %p126
    %p129 = scmp.ne.s32.totalorder %s114, %s128
    %p130 = scmp.eq.s32.totalorder %s20, 0
    %p131 = por %p129, %p130
    %s133 = sadd.s32 %s132, 1
    %p136 = scmp.eq.s32.totalorder %s14, 1
    %p137 = scmp.ne.s32.totalorder %s132, %s134
    %p138 = scmp.eq.s32.totalorder %s14, 0
    %p139 = por %p137, %p138
    %p140 = scmp.ne.s32.totalorder %s132, %s134
    %p141 = scmp.eq.s32.totalorder %s19, 1
    %p142 = por %p140, %p141
    %p143 = scmp.ne.s32.totalorder %s134, %s135
    %p144 = scmp.eq.s32.totalorder %s19, 0
    %p145 = por %p143, %p144
    %p146 = scmp.ne.s32.totalorder %s134, %s135
    %p147 = scmp.eq.s32.totalorder %s20, 1
    %p148 = por %p146, %p147
    %p150 = scmp.ne.s32.totalorder %s135, %s149
    %p151 = scmp.eq.s32.totalorder %s20, 0
    %p152 = por %p150, %p151
    %s153 = ssub.s32 %s14, %s21
    %p154 = scmp.eq.s32.totalorder %s153, 0
    %s156 = sadd.s32 %s155, 1
    %s157 = scalar_select %p154, %s155, %s156
    %p160 = pneg %p154
    %p161 = scmp.eq.s32.totalorder %s14, 1
    %p162 = por %p160, %p161
    %p163 = scmp.ne.s32.totalorder %s155, %s158
    %p164 = scmp.eq.s32.totalorder %s14, 0
    %p165 = por %p163, %p164
    %p166 = scmp.ne.s32.totalorder %s155, %s158
    %p167 = scmp.eq.s32.totalorder %s19, 1
    %p168 = por %p166, %p167
    %p169 = scmp.ne.s32.totalorder %s158, %s159
    %p170 = scmp.eq.s32.totalorder %s19, 0
    %p171 = por %p169, %p170
    %p172 = scmp.ne.s32.totalorder %s158, %s159
    %p173 = scmp.eq.s32.totalorder %s20, 1
    %p174 = por %p172, %p173
    %p176 = scmp.ne.s32.totalorder %s159, %s175
    %p177 = scmp.eq.s32.totalorder %s20, 0
    %p178 = por %p176, %p177
    %s179 = ssub.s32 %s14, %s21
    %p180 = scmp.eq.s32.totalorder %s179, 0
    %s182 = sadd.s32 %s181, 1
    %s183 = scalar_select %p180, %s181, %s182
    %p186 = pneg %p180
    %p187 = scmp.eq.s32.totalorder %s14, 1
    %p188 = por %p186, %p187
    %p189 = scmp.ne.s32.totalorder %s181, %s184
    %p190 = scmp.eq.s32.totalorder %s14, 0
    %p191 = por %p189, %p190
    %p192 = scmp.ne.s32.totalorder %s181, %s184
    %p193 = scmp.eq.s32.totalorder %s19, 1
    %p194 = por %p192, %p193
    %p195 = scmp.ne.s32.totalorder %s184, %s185
    %p196 = scmp.eq.s32.totalorder %s19, 0
    %p197 = por %p195, %p196
    %p198 = scmp.ne.s32.totalorder %s184, %s185
    %p199 = scmp.eq.s32.totalorder %s20, 1
    %p200 = por %p198, %p199
    %p202 = scmp.ne.s32.totalorder %s185, %s201
    %p203 = scmp.eq.s32.totalorder %s20, 0
    %p204 = por %p202, %p203
    %p205 = scmp.le.s32.totalorder 1, %s14
    %p206 = scmp.lt.s32.totalorder %s14, 3
    %p207 = pnand %p205, %p206
    %p208 = pneg %p207
    // Predicated region
    $region9: #{sepconv_forward.4} parent=5 // pred_check
      _
    $region10: #{sepconv_forward.4} parent=5 // pred_check_branch
      %210 = sbr.rel (%p207) target = $region12
    $region11: #{sepconv_forward.4} parent=5 // pred_region
      %s211 = ssub.s32 %s14, 1
      // Predicated region
      $region13: #{sepconv_forward.4} parent=11 // pred_check
        %p212 = pneg %p61
      $region14: #{sepconv_forward.4} parent=11 // pred_check_branch
        %214 = sbr.rel (%p212) target = $region16
      $region15: #{sepconv_forward.4} parent=11 // pred_region
        _
      $region16: #{sepconv_forward.4} parent=11 // pred_fallthru
        _
      // Predicated region
      $region17: #{sepconv_forward.4} parent=11 // pred_check
        %p215 = pneg %p82
      $region18: #{sepconv_forward.4} parent=11 // pred_check_branch
        %217 = sbr.rel (%p215) target = $region20
      $region19: #{sepconv_forward.4} parent=11 // pred_region
        _
      $region20: #{sepconv_forward.4} parent=11 // pred_fallthru
        _
      // Predicated region
      $region21: #{sepconv_forward.4} parent=11 // pred_check
        %p218 = pneg %p103
      $region22: #{sepconv_forward.4} parent=11 // pred_check_branch
        %220 = sbr.rel (%p218) target = $region24
      $region23: #{sepconv_forward.4} parent=11 // pred_region
        _
      $region24: #{sepconv_forward.4} parent=11 // pred_fallthru
        _
      // Predicated region
      $region25: #{sepconv_forward.4} parent=11 // pred_check
        %p221 = pneg %p124
      $region26: #{sepconv_forward.4} parent=11 // pred_check_branch
        %223 = sbr.rel (%p221) target = $region28
      $region27: #{sepconv_forward.4} parent=11 // pred_region
        _
      $region28: #{sepconv_forward.4} parent=11 // pred_fallthru
        _
      // Predicated region
      $region29: #{sepconv_forward.4} parent=11 // pred_check
        %p224 = pneg %p145
      $region30: #{sepconv_forward.4} parent=11 // pred_check_branch
        %226 = sbr.rel (%p224) target = $region32
      $region31: #{sepconv_forward.4} parent=11 // pred_region
        _
      $region32: #{sepconv_forward.4} parent=11 // pred_fallthru
        _
    $region12: #{sepconv_forward.4} parent=5 // pred_fallthru
      _
    %p227 = scmp.lt.s32.totalorder %s14, 2
    // Predicated region
    $region33: #{sepconv_forward.4} parent=5 // pred_check
      %p228 = pneg %p227
    $region34: #{sepconv_forward.4} parent=5 // pred_check_branch
      %230 = sbr.rel (%p228) target = $region36
    $region35: #{sepconv_forward.4} parent=5 // pred_region
      // Predicated region
      $region37: #{sepconv_forward.4} parent=35 // pred_check
        %p231 = pneg %p34
      $region38: #{sepconv_forward.4} parent=35 // pred_check_branch
        %233 = sbr.rel (%p231) target = $region40
      $region39: #{sepconv_forward.4} parent=35 // pred_region
        %p234 = scmp.lt.s32.totalorder %s14, 1
        %s235 = scalar_select %p234, %s14, 1
        %s236 = smul.addr %s235, 2
        %s237 = smul.addr %s236, 8
        %s238 = scalar_lea.vmem %s0, %s237
      $region40: #{sepconv_forward.4} parent=35 // pred_fallthru
        _
    $region36: #{sepconv_forward.4} parent=5 // pred_fallthru
      _
    %p239 = scmp.le.s32.totalorder 1, %s14
    %p240 = scmp.lt.s32.totalorder %s14, 3
    %p241 = pnand %p239, %p240
    %p242 = pneg %p241
    // Predicated region
    $region41: #{sepconv_forward.4} parent=5 // pred_check
      _
    $region42: #{sepconv_forward.4} parent=5 // pred_check_branch
      %244 = sbr.rel (%p241) target = $region44
    $region43: #{sepconv_forward.4} parent=5 // pred_region
      %s245 = ssub.s32 %s14, 1
      %p246 = scmp.lt.s32.totalorder %s19, 1
      %s247 = scalar_select %p246, %s19, 1
      %s248 = smul.addr %s247, 2
      %s249 = smul.addr %s248, 8
      %s250 = scalar_lea.vmem %s0, %s249
      %p251 = pneg %p40
      %p252 = pneg %p37
      %p253 = pneg %p61
      %p254 = pneg %p58
      %p255 = pneg %p82
      %p256 = pneg %p79
      %p257 = pneg %p103
      %p258 = pneg %p100
      %p259 = pneg %p124
      %p260 = pneg %p121
      %p261 = pneg %p145
      %p262 = pneg %p142
      %p263 = pneg %p171
      %p264 = pneg %p168
      %p265 = scmp.lt.s32.totalorder %s19, 1
      %s266 = scalar_select %p265, %s19, 1
      %s267 = smul.addr %s266, 2
      %s268 = smul.addr %s267, 8
      %s269 = scalar_lea.vmem %s6, %s268
      %p270 = pneg %p197
      %p271 = pneg %p194
      %p272 = scmp.lt.s32.totalorder %s19, 1
      %s273 = scalar_select %p272, %s19, 1
      %s274 = smul.addr %s273, 2
      %s275 = scalar_lea.vmem %s7, %s274
      %p276 = scmp.lt.s32.totalorder %s19, 1
      %s277 = scalar_select %p276, %s19, 1
      %s278 = smul.addr %s277, 2
      %s279 = smul.addr %s278, 8
      %s280 = scalar_lea.vmem %s0, %s279
      %p281 = scmp.lt.s32.totalorder %s19, 1
      %s282 = scalar_select %p281, %s19, 1
      %s283 = smul.addr %s282, 2
      %s284 = smul.addr %s283, 8
      %s285 = scalar_lea.vmem %s6, %s284
      %p286 = scmp.lt.s32.totalorder %s19, 1
      %s287 = scalar_select %p286, %s19, 1
      %s288 = smul.addr %s287, 2
      %s289 = scalar_lea.vmem %s7, %s288
      %v291 = vld [vmem:[%s280] sm:$0xff]
      %v292 = vld [vmem:[%s280 + $0x8] sm:$0xff]
      %v293 = vld [vmem:[%s1] sm:$0x1]
      %v295 = vlaneseq
      %v296 = vshrl.u32 %v295, 7
      %v297 = vsub.s32 0, %v296
      %v298 = vrot.slane %v293, %v297
      %v300 = vsub.f32 %v291, %v298
      %v301 = vsub.f32 %v292, %v298
      %v302 = vld [vmem:[%s2] sm:$0x1]
      %v304 = vlaneseq
      %v305 = vshrl.u32 %v304, 7
      %v306 = vsub.s32 0, %v305
      %v307 = vrot.slane %v302, %v306
      %v309 = vmul.f32 %v300, %v307
      %v310 = vmul.f32 %v301, %v307
      %v311 = vmax.f32 %v309, 0.0
      %v312 = vmax.f32 %v310, 0.0
      %vm313 = vcmask 581632
      %314 = vst.msk [vmem:[#allocation2] sm:$0x1] %vm313, 0.0
      %315 = vst.msk [vmem:[#allocation2 + $0x11] sm:$0x1] %vm313, 0.0
      %vm316 = vcmask 31744
      %317 = vst.msk [vmem:[#allocation2 + $0x1] sm:$0xff] %vm316, 0.0
      %318 = vst.msk [vmem:[#allocation2 + $0x9] sm:$0xff] %vm316, 0.0
      %vm319 = vcmask 589344
      %320 = vst.msk [vmem:[#allocation2 + $0x1] sm:$0xff] %vm319, 0.0
      %321 = vst.msk [vmem:[#allocation2 + $0x9] sm:$0xff] %vm319, 0.0
      %324 = vrot.lane.b32.xlu0 %v311, 4
      %v325 = vpop.permute.xlu0 %324
      %326 = vrot.lane.b32.xlu0 %v312, 4
      %v327 = vpop.permute.xlu0 %326
      %vm330 = vcmask 556064
      %331 = vst.msk [vmem:[#allocation2 + $0x1] sm:$0xff] %vm330, %v325
      %332 = vst.msk [vmem:[#allocation2 + $0x9] sm:$0xff] %vm330, %v327
      %v333 = vld [vmem:[#allocation2] sm:$0xff]
      %v334 = vld [vmem:[#allocation2 + $0x8] sm:$0xff]
      %v335 = vld [vmem:[#allocation2 + $0x10] sm:$0x3]
      %v336 = vld [vmem:[%s3] sm:$0xff]
      %v337 = vld [vmem:[%s3 + $0x8] sm:$0x1]
      %v338 = vlaneseq
      %v339 = vshrl.u32 %v338, 7
      %v340 = vsub.s32 0, %v339
      %v341 = vrot.slane %v336, %v340
      %v342 = vmul.f32 %v333, %v341
      %v343 = vmul.f32 %v334, %v341
      %v344 = vadd.f32 %v342, 0.0
      %v345 = vadd.f32 %v343, 0.0
      %v346 = vlaneseq
      %v347 = vshrl.u32 %v346, 7
      %v348 = vsub.s32 1, %v347
      %v349 = vrot.slane %v336, %v348
      %351 = vrot.lane.b32.xlu0 %v349, 4
      %v352 = vpop.permute.xlu0 %351
      %v354 = vmul.f32 %v333, %v352
      %v355 = vmul.f32 %v334, %v352
      %358 = vrot.lane.b32.xlu0 %v354, 124
      %v359 = vpop.permute.xlu0 %358
      %360 = vrot.lane.b32.xlu0 %v355, 124
      %v361 = vpop.permute.xlu0 %360
      %v364 = vadd.f32 %v344, %v359
      %v365 = vadd.f32 %v345, %v361
      %v366 = vlaneseq
      %v367 = vshrl.u32 %v366, 7
      %v368 = vsub.s32 2, %v367
      %v369 = vrot.slane %v336, %v368
      %371 = vrot.lane.b32.xlu0 %v369, 8
      %v372 = vpop.permute.xlu0 %371
      %v374 = vmul.f32 %v333, %v372
      %v375 = vmul.f32 %v334, %v372
      %378 = vrot.lane.b32.xlu0 %v374, 120
      %v379 = vpop.permute.xlu0 %378
      %380 = vrot.lane.b32.xlu0 %v375, 120
      %v381 = vpop.permute.xlu0 %380
      %v384 = vadd.f32 %v364, %v379
      %v385 = vadd.f32 %v365, %v381
      %v386 = vlaneseq
      %v387 = vshrl.u32 %v386, 7
      %v388 = vsub.s32 3, %v387
      %v389 = vrot.slane %v336, %v388
      %v390 = vmul.f32 %v333, %v389
      %v391 = vmul.f32 %v334, %v389
      %v392 = vmul.f32 %v335, %v389
      %vm396 = vcmask 1046528
      %v397 = vrot.slane %v390, 1
      %v398 = vrot.slane %v391, 1
      %v399 = vsel %vm396, %v397, %v398
      %v400 = vrot.slane %v392, 1
      %v401 = vsel %vm396, %v398, %v400
      %v404 = vadd.f32 %v384, %v399
      %v405 = vadd.f32 %v385, %v401
      %v406 = vlaneseq
      %v407 = vshrl.u32 %v406, 7
      %v408 = vsub.s32 4, %v407
      %v409 = vrot.slane %v336, %v408
      %411 = vrot.lane.b32.xlu0 %v409, 4
      %v412 = vpop.permute.xlu0 %411
      %v414 = vmul.f32 %v333, %v412
      %v415 = vmul.f32 %v334, %v412
      %v416 = vmul.f32 %v335, %v412
      %v420 = vrot.slane %v414, 1
      %v421 = vrot.slane %v415, 1
      %v422 = vsel %vm396, %v420, %v421
      %v423 = vrot.slane %v416, 1
      %v424 = vsel %vm396, %v421, %v423
      %425 = vrot.lane.b32.xlu0 %v422, 124
      %v426 = vpop.permute.xlu0 %425
      %427 = vrot.lane.b32.xlu0 %v424, 124
      %v428 = vpop.permute.xlu0 %427
      %v431 = vadd.f32 %v404, %v426
      %v432 = vadd.f32 %v405, %v428
      %v433 = vlaneseq
      %v434 = vshrl.u32 %v433, 7
      %v435 = vsub.s32 5, %v434
      %v436 = vrot.slane %v336, %v435
      %438 = vrot.lane.b32.xlu0 %v436, 8
      %v439 = vpop.permute.xlu0 %438
      %v441 = vmul.f32 %v333, %v439
      %v442 = vmul.f32 %v334, %v439
      %v443 = vmul.f32 %v335, %v439
      %v447 = vrot.slane %v441, 1
      %v448 = vrot.slane %v442, 1
      %v449 = vsel %vm396, %v447, %v448
      %v450 = vrot.slane %v443, 1
      %v451 = vsel %vm396, %v448, %v450
      %452 = vrot.lane.b32.xlu0 %v449, 120
      %v453 = vpop.permute.xlu0 %452
      %454 = vrot.lane.b32.xlu0 %v451, 120
      %v455 = vpop.permute.xlu0 %454
      %v458 = vadd.f32 %v431, %v453
      %v459 = vadd.f32 %v432, %v455
      %v460 = vlaneseq
      %v461 = vshrl.u32 %v460, 7
      %v462 = vsub.s32 6, %v461
      %v463 = vrot.slane %v336, %v462
      %v464 = vmul.f32 %v333, %v463
      %v465 = vmul.f32 %v334, %v463
      %v466 = vmul.f32 %v335, %v463
      %vm470 = vcmask 1045504
      %v471 = vrot.slane %v464, 2
      %v472 = vrot.slane %v465, 2
      %v473 = vsel %vm470, %v471, %v472
      %v474 = vrot.slane %v466, 2
      %v475 = vsel %vm470, %v472, %v474
      %v478 = vadd.f32 %v458, %v473
      %v479 = vadd.f32 %v459, %v475
      %v480 = vlaneseq
      %v481 = vshrl.u32 %v480, 7
      %v482 = vsub.s32 7, %v481
      %v483 = vrot.slane %v336, %v482
      %485 = vrot.lane.b32.xlu0 %v483, 4
      %v486 = vpop.permute.xlu0 %485
      %v488 = vmul.f32 %v333, %v486
      %v489 = vmul.f32 %v334, %v486
      %v490 = vmul.f32 %v335, %v486
      %v494 = vrot.slane %v488, 2
      %v495 = vrot.slane %v489, 2
      %v496 = vsel %vm470, %v494, %v495
      %v497 = vrot.slane %v490, 2
      %v498 = vsel %vm470, %v495, %v497
      %499 = vrot.lane.b32.xlu0 %v496, 124
      %v500 = vpop.permute.xlu0 %499
      %501 = vrot.lane.b32.xlu0 %v498, 124
      %v502 = vpop.permute.xlu0 %501
      %v505 = vadd.f32 %v478, %v500
      %v506 = vadd.f32 %v479, %v502
      %v507 = vlaneseq
      %v508 = vshrl.u32 %v507, 7
      %v509 = vsub.s32 0, %v508
      %v510 = vrot.slane %v337, %v509
      %512 = vrot.lane.b32.xlu0 %v510, 8
      %v513 = vpop.permute.xlu0 %512
      %v515 = vmul.f32 %v333, %v513
      %v516 = vmul.f32 %v334, %v513
      %v517 = vmul.f32 %v335, %v513
      %v521 = vrot.slane %v515, 2
      %v522 = vrot.slane %v516, 2
      %v523 = vsel %vm470, %v521, %v522
      %v524 = vrot.slane %v517, 2
      %v525 = vsel %vm470, %v522, %v524
      %526 = vrot.lane.b32.xlu0 %v523, 120
      %v527 = vpop.permute.xlu0 %526
      %528 = vrot.lane.b32.xlu0 %v525, 120
      %v529 = vpop.permute.xlu0 %528
      %v532 = vadd.f32 %v505, %v527
      %v533 = vadd.f32 %v506, %v529
      %v534 = vpack.c.bf16 %v533, %v532
      %v535 = vld [vmem:[%s4] sm:$0xf]
      %v536 = vld [vmem:[%s4 + $0x4] sm:$0xf]
      %v537 = vld [vmem:[%s4 + $0x8] sm:$0xf]
      %v538 = vld [vmem:[%s4 + $0xc] sm:$0xf]
      %v539 = vld [vmem:[%s4 + $0x10] sm:$0xf]
      %v540 = vld [vmem:[%s4 + $0x14] sm:$0xf]
      %v541 = vld [vmem:[%s4 + $0x18] sm:$0xf]
      %v542 = vld [vmem:[%s4 + $0x1c] sm:$0xf]
      %v543 = vunpack.c.l.bf16 %v534
      %v544 = vunpack.c.h.bf16 %v534
      %v545 = vsub.f32 %v532, %v543
      %v546 = vsub.f32 %v533, %v544
      %v547 = vpack.c.bf16 %v546, %v545
      %v556 = vunpack.c.l.b16 %v535
      %v557 = vunpack.c.l.b16 %v536
      %v558 = vunpack.c.l.b16 %v537
      %v559 = vunpack.c.l.b16 %v538
      %v560 = vunpack.c.l.b16 %v539
      %v561 = vunpack.c.l.b16 %v540
      %v562 = vunpack.c.l.b16 %v541
      %v563 = vunpack.c.l.b16 %v542
      %v564 = vpack.c.b16 %v557, %v556
      %v565 = vpack.c.b16 %v559, %v558
      %v566 = vpack.c.b16 %v561, %v560
      %v567 = vpack.c.b16 %v563, %v562
      %vm572 = vcmask 523264
      %v574 = vsel %vm572, %v547, 0
      %576 = vmatprep.subr.bf16.mxu0 0
      %577 = vmatpush1.bf16.msra.mxu0 %v564
      %578 = vmatprep.subr.bf16.mxu0 0
      %579 = vmatpush1.bf16.msra.mxu0 %v565
      %580 = vmatprep.subr.bf16.mxu0 0
      %581 = vmatpush1.bf16.msra.mxu0 %v566
      %582 = vmatprep.subr.bf16.mxu0 0
      %583 = vmatpush1.bf16.msra.mxu0 %v567
      %584 = vmatprep.subr.bf16.mxu0 0
      %585 = vmatpush1.bf16.msra.mxu0 0
      %586 = vmatprep.subr.bf16.mxu0 0
      %587 = vmatpush1.bf16.msra.mxu0 0
      %588 = vmatprep.subr.bf16.mxu0 0
      %589 = vmatpush1.bf16.msra.mxu0 0
      %590 = vmatprep.subr.bf16.mxu0 0
      %591 = vmatpush1.bf16.msra.mxu0 0
      %592 = vmatprep.subr.bf16.mxu0 0
      %593 = vmatpush1.bf16.msra.mxu0 0
      %594 = vmatprep.subr.bf16.mxu0 0
      %595 = vmatpush1.bf16.msra.mxu0 0
      %596 = vmatprep.subr.bf16.mxu0 0
      %597 = vmatpush1.bf16.msra.mxu0 0
      %598 = vmatprep.subr.bf16.mxu0 0
      %599 = vmatpush1.bf16.msra.mxu0 0
      %600 = vmatprep.subr.bf16.mxu0 0
      %601 = vmatpush1.bf16.msra.mxu0 0
      %602 = vmatprep.subr.bf16.mxu0 0
      %603 = vmatpush1.bf16.msra.mxu0 0
      %604 = vmatprep.subr.bf16.mxu0 0
      %605 = vmatpush1.bf16.msra.mxu0 0
      %606 = vmatprep.subr.bf16.mxu0 0
      %607 = vmatpush1.bf16.msra.mxu0 0
      %608 = vmatprep.mubr.bf16.mxu0 0
      %609 = vmatmul.mubr.bf16.gmra.mrb[0].mxu0 %v574
      %v610 = vpop.f32.mrb[0].mxu0
      %v611 = vadd.f32 0.0, %v610
      %v612 = vpop.f32.mrb[0].mxu0
      %v613 = vpop.f32.mrb[0].mxu0
      %v614 = vadd.f32 0.0, %v613
      %v615 = vpop.f32.mrb[0].mxu0
      %616 = vdwg.mxu0
      %v618 = vsel %vm572, %v534, 0
      %620 = vmatprep.subr.bf16.mxu0 0
      %621 = vmatpush1.bf16.msra.mxu0 %v564
      %622 = vmatprep.subr.bf16.mxu0 0
      %623 = vmatpush1.bf16.msra.mxu0 %v565
      %624 = vmatprep.subr.bf16.mxu0 0
      %625 = vmatpush1.bf16.msra.mxu0 %v566
      %626 = vmatprep.subr.bf16.mxu0 0
      %627 = vmatpush1.bf16.msra.mxu0 %v567
      %628 = vmatprep.subr.bf16.mxu0 0
      %629 = vmatpush1.bf16.msra.mxu0 0
      %630 = vmatprep.subr.bf16.mxu0 0
      %631 = vmatpush1.bf16.msra.mxu0 0
      %632 = vmatprep.subr.bf16.mxu0 0
      %633 = vmatpush1.bf16.msra.mxu0 0
      %634 = vmatprep.subr.bf16.mxu0 0
      %635 = vmatpush1.bf16.msra.mxu0 0
      %636 = vmatprep.subr.bf16.mxu0 0
      %637 = vmatpush1.bf16.msra.mxu0 0
      %638 = vmatprep.subr.bf16.mxu0 0
      %639 = vmatpush1.bf16.msra.mxu0 0
      %640 = vmatprep.subr.bf16.mxu0 0
      %641 = vmatpush1.bf16.msra.mxu0 0
      %642 = vmatprep.subr.bf16.mxu0 0
      %643 = vmatpush1.bf16.msra.mxu0 0
      %644 = vmatprep.subr.bf16.mxu0 0
      %645 = vmatpush1.bf16.msra.mxu0 0
      %646 = vmatprep.subr.bf16.mxu0 0
      %647 = vmatpush1.bf16.msra.mxu0 0
      %648 = vmatprep.subr.bf16.mxu0 0
      %649 = vmatpush1.bf16.msra.mxu0 0
      %650 = vmatprep.subr.bf16.mxu0 0
      %651 = vmatpush1.bf16.msra.mxu0 0
      %652 = vmatprep.mubr.bf16.mxu0 0
      %653 = vmatmul.mubr.bf16.gmra.mrb[0].mxu0 %v618
      %v654 = vpop.f32.mrb[0].mxu0
      %v655 = vadd.f32 %v611, %v654
      %v656 = vpop.f32.mrb[0].mxu0
      %v657 = vpop.f32.mrb[0].mxu0
      %v658 = vadd.f32 %v614, %v657
      %v659 = vpop.f32.mrb[0].mxu0
      %660 = vdwg.mxu0
      %v661 = vld [vmem:[%s5] sm:$0xf]
      %v662 = vld [vmem:[%s5 + $0x4] sm:$0xf]
      %v663 = vld [vmem:[%s5 + $0x8] sm:$0xf]
      %v664 = vld [vmem:[%s5 + $0xc] sm:$0xf]
      %v665 = vld [vmem:[%s5 + $0x10] sm:$0xf]
      %v666 = vld [vmem:[%s5 + $0x14] sm:$0xf]
      %v667 = vld [vmem:[%s5 + $0x18] sm:$0xf]
      %v668 = vld [vmem:[%s5 + $0x1c] sm:$0xf]
      %v677 = vunpack.c.l.b16 %v661
      %v678 = vunpack.c.l.b16 %v662
      %v679 = vunpack.c.l.b16 %v663
      %v680 = vunpack.c.l.b16 %v664
      %v681 = vunpack.c.l.b16 %v665
      %v682 = vunpack.c.l.b16 %v666
      %v683 = vunpack.c.l.b16 %v667
      %v684 = vunpack.c.l.b16 %v668
      %v685 = vpack.c.b16 %v678, %v677
      %v686 = vpack.c.b16 %v680, %v679
      %v687 = vpack.c.b16 %v682, %v681
      %v688 = vpack.c.b16 %v684, %v683
      %693 = vmatprep.subr.bf16.mxu0 0
      %694 = vmatpush1.bf16.msra.mxu0 %v685
      %695 = vmatprep.subr.bf16.mxu0 0
      %696 = vmatpush1.bf16.msra.mxu0 %v686
      %697 = vmatprep.subr.bf16.mxu0 0
      %698 = vmatpush1.bf16.msra.mxu0 %v687
      %699 = vmatprep.subr.bf16.mxu0 0
      %700 = vmatpush1.bf16.msra.mxu0 %v688
      %701 = vmatprep.subr.bf16.mxu0 0
      %702 = vmatpush1.bf16.msra.mxu0 0
      %703 = vmatprep.subr.bf16.mxu0 0
      %704 = vmatpush1.bf16.msra.mxu0 0
      %705 = vmatprep.subr.bf16.mxu0 0
      %706 = vmatpush1.bf16.msra.mxu0 0
      %707 = vmatprep.subr.bf16.mxu0 0
      %708 = vmatpush1.bf16.msra.mxu0 0
      %709 = vmatprep.subr.bf16.mxu0 0
      %710 = vmatpush1.bf16.msra.mxu0 0
      %711 = vmatprep.subr.bf16.mxu0 0
      %712 = vmatpush1.bf16.msra.mxu0 0
      %713 = vmatprep.subr.bf16.mxu0 0
      %714 = vmatpush1.bf16.msra.mxu0 0
      %715 = vmatprep.subr.bf16.mxu0 0
      %716 = vmatpush1.bf16.msra.mxu0 0
      %717 = vmatprep.subr.bf16.mxu0 0
      %718 = vmatpush1.bf16.msra.mxu0 0
      %719 = vmatprep.subr.bf16.mxu0 0
      %720 = vmatpush1.bf16.msra.mxu0 0
      %721 = vmatprep.subr.bf16.mxu0 0
      %722 = vmatpush1.bf16.msra.mxu0 0
      %723 = vmatprep.subr.bf16.mxu0 0
      %724 = vmatpush1.bf16.msra.mxu0 0
      %725 = vmatprep.mubr.bf16.mxu0 0
      %726 = vmatmul.mubr.bf16.gmra.mrb[0].mxu0 %v618
      %v727 = vpop.f32.mrb[0].mxu0
      %v728 = vadd.f32 0.0, %v727
      %v729 = vpop.f32.mrb[0].mxu0
      %v730 = vpop.f32.mrb[0].mxu0
      %v731 = vadd.f32 0.0, %v730
      %v732 = vpop.f32.mrb[0].mxu0
      %733 = vdwg.mxu0
      %v734 = vadd.f32 %v655, %v728
      %v735 = vadd.f32 %v658, %v731
      %736 = vst [vmem:[%s285] sm:$0xff] %v734
      %737 = vst [vmem:[%s285 + $0x8] sm:$0xff] %v735
      %v738 = vadd.f32 %v734, %v735
      %v739 = vrot.slane %v738, 4
      %v740 = vadd.f32 %v738, %v739
      %v741 = vrot.slane %v740, 2
      %v742 = vadd.f32 %v740, %v741
      %v743 = vrot.slane %v742, 1
      %v744 = vadd.f32 %v742, %v743
      %745 = vst [vmem:[%s289] sm:$0x1] %v744
      %v746 = vmul.f32 %v734, %v734
      %v747 = vmul.f32 %v735, %v735
      %v748 = vadd.f32 %v746, %v747
      %v749 = vrot.slane %v748, 4
      %v750 = vadd.f32 %v748, %v749
      %v751 = vrot.slane %v750, 2
      %v752 = vadd.f32 %v750, %v751
      %v753 = vrot.slane %v752, 1
      %v754 = vadd.f32 %v752, %v753
      %755 = vst [vmem:[%s289 + $0x1] sm:$0x1] %v754
      %p756 = scmp.lt.s32.totalorder %s19, 1
      %s757 = scalar_select %p756, %s19, 1
      %s758 = smul.addr %s757, 2
      %s759 = smul.addr %s758, 8
      %s760 = scalar_lea.vmem %s6, %s759
      %p761 = scmp.lt.s32.totalorder %s19, 1
      %s762 = scalar_select %p761, %s19, 1
      %s763 = smul.addr %s762, 2
      %s764 = scalar_lea.vmem %s7, %s763
      // Predicated region
      $region45: #{sepconv_forward.4} parent=43 // pred_check
        %p765 = pneg %p168
      $region46: #{sepconv_forward.4} parent=43 // pred_check_branch
        %767 = sbr.rel (%p765) target = $region48
      $region47: #{sepconv_forward.4} parent=43 // pred_region
        _
      $region48: #{sepconv_forward.4} parent=43 // pred_fallthru
        _
      // Predicated region
      $region49: #{sepconv_forward.4} parent=43 // pred_check
        %p768 = pneg %p194
      $region50: #{sepconv_forward.4} parent=43 // pred_check_branch
        %770 = sbr.rel (%p768) target = $region52
      $region51: #{sepconv_forward.4} parent=43 // pred_region
        _
      $region52: #{sepconv_forward.4} parent=43 // pred_fallthru
        _
    $region44: #{sepconv_forward.4} parent=5 // pred_fallthru
      _
    %p771 = scmp.le.s32.totalorder 2, %s14
    // Predicated region
    $region53: #{sepconv_forward.4} parent=5 // pred_check
      %p772 = pneg %p771
    $region54: #{sepconv_forward.4} parent=5 // pred_check_branch
      %774 = sbr.rel (%p772) target = $region56
    $region55: #{sepconv_forward.4} parent=5 // pred_region
      %s775 = ssub.s32 %s14, 2
      // Predicated region
      $region57: #{sepconv_forward.4} parent=55 // pred_check
        %p776 = pneg %p174
      $region58: #{sepconv_forward.4} parent=55 // pred_check_branch
        %778 = sbr.rel (%p776) target = $region60
      $region59: #{sepconv_forward.4} parent=55 // pred_region
        %p779 = scmp.lt.s32.totalorder %s20, 1
        %s780 = scalar_select %p779, %s20, 1
        %s781 = smul.addr %s780, 2
        %s782 = smul.addr %s781, 8
        %s783 = scalar_lea.vmem %s6, %s782
      $region60: #{sepconv_forward.4} parent=55 // pred_fallthru
        _
      // Predicated region
      $region61: #{sepconv_forward.4} parent=55 // pred_check
        %p784 = pneg %p200
      $region62: #{sepconv_forward.4} parent=55 // pred_check_branch
        %786 = sbr.rel (%p784) target = $region64
      $region63: #{sepconv_forward.4} parent=55 // pred_region
        %p787 = scmp.lt.s32.totalorder %s20, 1
        %s788 = scalar_select %p787, %s20, 1
        %s789 = smul.addr %s788, 2
        %s790 = scalar_lea.vmem %s7, %s789
      $region64: #{sepconv_forward.4} parent=55 // pred_fallthru
        _
    $region56: #{sepconv_forward.4} parent=5 // pred_fallthru
      _
  $region6: #{sepconv_forward.4} parent=0 // loop_footer
    %s18 = sadd.s32 1, %s14
  $region7: #{sepconv_forward.4} parent=0 // loop_footer_branch
    %13 = sbr.rel target = $region3
  $region8: #{sepconv_forward.4} parent=0 // loop_exit
    _

// kernel: sepconv_forward.5
$region0: #{sepconv_forward.5}
  #allocation0 [shape = 'u32[]', space=smem, size = 0x4, offset = 0x4, fixed_abs, tag = 'smem constant byte address 0x4 - core index']
  #allocation1 [shape = 'u32[144,128]{1,0:T(1,128)}', space=vmem, size = 0x12000, scoped, tag = 'internal scratch']
  %s0 = inlined_call_operand.vmem [shape: f32[32,128], index: 0, kind: input, shape index: {}]
  %s1 = inlined_call_operand.vmem [shape: f32[1,128], index: 1, kind: input, shape index: {}]
  %s2 = inlined_call_operand.vmem [shape: f32[1,128], index: 2, kind: input, shape index: {}]
  %s3 = inlined_call_operand.vmem [shape: f32[32,128], index: 3, kind: output, shape index: {}]
  %s4 = sld [smem:[#allocation0]]
  $region22: #{sepconv_forward.5} parent=0
    _
  %s6 = ssub.s32 1, %s4
  %s7 = scalar_select 0, %s6, %s4
  // Predicated region
  $region2: #{sepconv_forward.5} parent=0 // pred_check
    _
  $region3: #{sepconv_forward.5} parent=0 // pred_check_branch
    %9 = sbr.rel (0) target = $region5
  $region4: #{sepconv_forward.5} parent=0 // pred_region
    _
  $region5: #{sepconv_forward.5} parent=0 // pred_fallthru
    _
  // Predicated region
  $region6: #{sepconv_forward.5} parent=0 // pred_check
    _
  $region7: #{sepconv_forward.5} parent=0 // pred_check_branch
    %11 = sbr.rel (0) target = $region9
  $region8: #{sepconv_forward.5} parent=0 // pred_region
    _
  $region9: #{sepconv_forward.5} parent=0 // pred_fallthru
    _
  // Predicated region
  $region10: #{sepconv_forward.5} parent=0 // pred_check
    _
  $region11: #{sepconv_forward.5} parent=0 // pred_check_branch
    %13 = sbr.rel (0) target = $region13
  $region12: #{sepconv_forward.5} parent=0 // pred_region
    _
  $region13: #{sepconv_forward.5} parent=0 // pred_fallthru
    _
  %v14 = vld [vmem:[%s0] sm:$0xff]
  %v15 = vld [vmem:[%s0 + $0x8] sm:$0xff]
  %v16 = vld [vmem:[%s0 + $0x10] sm:$0xff]
  %v17 = vld [vmem:[%s0 + $0x18] sm:$0xff]
  %v18 = vld [vmem:[%s1] sm:$0x1]
  %v20 = vlaneseq
  %v21 = vshrl.u32 %v20, 7
  %v22 = vsub.s32 0, %v21
  %v23 = vrot.slane %v18, %v22
  %v25 = vsub.f32 %v14, %v23
  %v26 = vsub.f32 %v15, %v23
  %v27 = vsub.f32 %v16, %v23
  %v28 = vsub.f32 %v17, %v23
  %v29 = vld [vmem:[%s2] sm:$0x1]
  %v31 = vlaneseq
  %v32 = vshrl.u32 %v31, 7
  %v33 = vsub.s32 0, %v32
  %v34 = vrot.slane %v29, %v33
  %v36 = vmul.f32 %v25, %v34
  %v37 = vmul.f32 %v26, %v34
  %v38 = vmul.f32 %v27, %v34
  %v39 = vmul.f32 %v28, %v34
  %40 = vst [vmem:[%s3] sm:$0xff] %v36
  %41 = vst [vmem:[%s3 + $0x8] sm:$0xff] %v37
  %42 = vst [vmem:[%s3 + $0x10] sm:$0xff] %v38
  %43 = vst [vmem:[%s3 + $0x18] sm:$0xff] %v39
  // Predicated region
  $region14: #{sepconv_forward.5} parent=0 // pred_check
    _
  $region15: #{sepconv_forward.5} parent=0 // pred_check_branch
    %45 = sbr.rel (0) target = $region17
  $region16: #{sepconv_forward.5} parent=0 // pred_region
    _
  $region17: #{sepconv_forward.5} parent=0 // pred_fallthru
    _
  // Predicated region
  $region18: #{sepconv_forward.5} parent=0 // pred_check
    _
  $region19: #{sepconv_forward.5} parent=0 // pred_check_branch
    %47 = sbr.rel (0) target = $region21
  $region20: #{sepconv_forward.5} parent=0 // pred_region
    _
  $region21: #{sepconv_forward.5} parent=0 // pred_fallthru
    _

</llo_original>
